<compile_context>
chip_gen: v6e
topology: v6e:2x2x1
jax: 0.10.0
libtpu: 0.0.40
codegen_flags: <defaults>
</compile_context>

<pallas_src>
import math
import jax
import jax.numpy as jnp
from jax.experimental import pallas as pl
from jax.experimental.pallas import tpu as pltpu

# ----- small deterministic BERT config (consistent with the module's forward) -----
B, S = 2, 8          # batch, sequence length
H = 32               # hidden size
HEADS = 2            # attention heads
DH = H // HEADS      # head dim
I = 64               # FFN intermediate size
LAYERS = 2           # encoder layers
VOCAB = 64
TYPE_VOCAB = 2
MAX_POS = 16
EPS = 1e-12
BS = B * S


def _layernorm(x, gamma, beta):
    mean = jnp.mean(x, axis=-1, keepdims=True)
    var = jnp.mean(jnp.square(x - mean), axis=-1, keepdims=True)
    return (x - mean) * jax.lax.rsqrt(var + EPS) * gamma + beta


# ------------------------------ fused Pallas kernel -------------------------------

def fused_bert_kernel(vl_ref,                                   # SMEM (B,) int32
                      x_emb_ref, emb_g_ref, emb_b_ref,
                      qkvw_ref, qkvb_ref, wo_ref, bo_ref,
                      g1_ref, be1_ref, w1_ref, b1_ref, w2_ref, b2_ref,
                      g2_ref, be2_ref, pool_w_ref, pool_b_ref,
                      pooled_ref, x_scr):
    layer = pl.program_id(0)

    # Layer 0: embedding LayerNorm into the VMEM-resident activation carry.
    @pl.when(layer == 0)
    def _():
        x_scr[...] = _layernorm(x_emb_ref[...].astype(jnp.float32),
                                emb_g_ref[...], emb_b_ref[...])

    x = x_scr[...]                                              # (B*S, H) f32

    # Additive attention mask built in-kernel from valid_length (SMEM scalars).
    key_idx = jax.lax.broadcasted_iota(jnp.int32, (1, 1, S), 2)
    neg = jnp.concatenate(
        [jnp.where(key_idx < vl_ref[b], 0.0, -1e9) for b in range(B)],
        axis=0)                                                 # (B, 1, S)

    # Fused QKV projection over the whole (B*S, H) slab.
    qkv = jnp.dot(x, qkvw_ref[...], preferred_element_type=jnp.float32) + qkvb_ref[...]
    q, k, v = qkv[:, 0:H], qkv[:, H:2 * H], qkv[:, 2 * H:3 * H]

    scale = 1.0 / math.sqrt(DH)
    ctx_heads = []
    for h in range(HEADS):                                      # tiny static loop, batched over B
        sl = slice(h * DH, (h + 1) * DH)
        qh = q[:, sl].reshape(B, S, DH)
        kh = k[:, sl].reshape(B, S, DH)
        vh = v[:, sl].reshape(B, S, DH)
        sc = jnp.einsum('bqd,bkd->bqk', qh, kh,
                        preferred_element_type=jnp.float32) * scale + neg
        sc = sc - jnp.max(sc, axis=-1, keepdims=True)
        p = jnp.exp(sc)
        p = p * pl.reciprocal(jnp.sum(p, axis=-1, keepdims=True), approx=True)
        ctx_heads.append(jnp.einsum('bqk,bkd->bqd', p, vh,
                                    preferred_element_type=jnp.float32))
    ctx = jnp.concatenate(ctx_heads, axis=-1).reshape(BS, H)

    # Single full-width output projection (K = H, no per-head slices / serial accum).
    attn = jnp.dot(ctx, wo_ref[...], preferred_element_type=jnp.float32) + bo_ref[...]
    h1 = _layernorm(x + attn, g1_ref[...], be1_ref[...])

    ff = jnp.dot(h1, w1_ref[...], preferred_element_type=jnp.float32) + b1_ref[...]
    # TODO(synk): reference BERT uses the exact erf GELU; tanh approximation kept here
    # (erf lowering support inside Mosaic is not guaranteed) — small systematic delta.
    ff = jax.nn.gelu(ff, approximate=True)
    ff = jnp.dot(ff, w2_ref[...], preferred_element_type=jnp.float32) + b2_ref[...]
    h2 = _layernorm(h1 + ff, g2_ref[...], be2_ref[...])

    x_scr[...] = h2                                             # activation carry

    # Last layer: fused pooler — pooled_output = tanh(cls @ Wp + bp).
    @pl.when(layer == LAYERS - 1)
    def _():
        cls = jnp.concatenate([h2[b * S:b * S + 1, :] for b in range(B)], axis=0)  # (B, H)
        pooled_ref[...] = jnp.tanh(
            jnp.dot(cls, pool_w_ref[...], preferred_element_type=jnp.float32)
            + pool_b_ref[...]).astype(pooled_ref.dtype)


# --------------------------------- wrapper -----------------------------------------

def kobert_forward(params, input_ids, valid_length, token_type_ids):
    # Embedding gathers (glue, plain JAX): word + position + token-type.
    x = (jnp.take(params['word_emb'], input_ids.astype(jnp.int32), axis=0)
         + params['pos_emb'][None, :S, :]
         + jnp.take(params['type_emb'], token_type_ids.astype(jnp.int32), axis=0))
    x_emb = x.reshape(BS, H).astype(jnp.float32)

    layers = params['layers']

    def stack(name):
        return jnp.stack([lp[name] for lp in layers], axis=0)

    qkv_w, qkv_b = stack('qkv_w'), stack('qkv_b')
    wo, bo = stack('wo'), stack('bo')
    ln1_g, ln1_b = stack('ln1_g'), stack('ln1_b')
    w1, b1 = stack('w1'), stack('b1')
    w2, b2 = stack('w2'), stack('b2')
    ln2_g, ln2_b = stack('ln2_g'), stack('ln2_b')

    def const_spec(shape):
        n = len(shape)
        return pl.BlockSpec(shape, lambda l, vl, _n=n: (0,) * _n)

    def per_layer_spec(shape):          # `shape` excludes the leading LAYERS dim
        n = len(shape)
        return pl.BlockSpec((None,) + shape, lambda l, vl, _n=n: (l,) + (0,) * _n)

    in_specs = [
        const_spec((BS, H)),                                    # x_emb
        const_spec((1, H)), const_spec((1, H)),                 # emb LayerNorm
        per_layer_spec((H, 3 * H)), per_layer_spec((1, 3 * H)),  # QKV
        per_layer_spec((H, H)), per_layer_spec((1, H)),          # attn out proj
        per_layer_spec((1, H)), per_layer_spec((1, H)),          # LN1
        per_layer_spec((H, I)), per_layer_spec((1, I)),          # FFN in
        per_layer_spec((I, H)), per_layer_spec((1, H)),          # FFN out
        per_layer_spec((1, H)), per_layer_spec((1, H)),          # LN2
        const_spec((H, H)), const_spec((1, H)),                  # pooler
    ]

    pooled = pl.pallas_call(
        fused_bert_kernel,
        out_shape=jax.ShapeDtypeStruct((B, H), jnp.float32),
        grid_spec=pltpu.PrefetchScalarGridSpec(
            num_scalar_prefetch=1,
            grid=(LAYERS,),
            in_specs=in_specs,
            out_specs=pl.BlockSpec((B, H), lambda l, vl: (0, 0)),
            scratch_shapes=[pltpu.VMEM((BS, H), jnp.float32)],
        ),
        # single sequential layer loop on one TensorCore (latency-bound workload)
        compiler_params=pltpu.CompilerParams(dimension_semantics=("arbitrary",)),
    )(valid_length.astype(jnp.int32), x_emb,
      params['emb_ln_g'], params['emb_ln_b'],
      qkv_w, qkv_b, wo, bo, ln1_g, ln1_b, w1, b1, w2, b2, ln2_g, ln2_b,
      params['pool_w'], params['pool_b'])
    return pooled


# ------------------------------ parameters / main ----------------------------------

def init_params(key):
    keys = iter(jax.random.split(key, 8 + 4 * LAYERS))

    def nrm(shape, scale=0.02):
        return (scale * jax.random.normal(next(keys), shape)).astype(jnp.float32)

    params = {
        'word_emb': nrm((VOCAB, H)),
        'pos_emb': nrm((MAX_POS, H)),
        'type_emb': nrm((TYPE_VOCAB, H)),
        'emb_ln_g': jnp.ones((1, H), jnp.float32),
        'emb_ln_b': jnp.zeros((1, H), jnp.float32),
        'pool_w': nrm((H, H)),
        'pool_b': jnp.zeros((1, H), jnp.float32),
        'layers': [],
    }
    for _ in range(LAYERS):
        params['layers'].append({
            'qkv_w': nrm((H, 3 * H)), 'qkv_b': jnp.zeros((1, 3 * H), jnp.float32),
            'wo': nrm((H, H)),        'bo': jnp.zeros((1, H), jnp.float32),
            'ln1_g': jnp.ones((1, H), jnp.float32), 'ln1_b': jnp.zeros((1, H), jnp.float32),
            'w1': nrm((H, I)),        'b1': jnp.zeros((1, I), jnp.float32),
            'w2': nrm((I, H)),        'b2': jnp.zeros((1, H), jnp.float32),
            'ln2_g': jnp.ones((1, H), jnp.float32), 'ln2_b': jnp.zeros((1, H), jnp.float32),
        })
    return params


if __name__ == "__main__":
    key = jax.random.PRNGKey(0)
    kp, ki = jax.random.split(key, 2)
    params = init_params(kp)

    input_ids = jax.random.randint(ki, (B, S), 0, VOCAB, dtype=jnp.int32)
    token_type_ids = jnp.zeros((B, S), jnp.int32)
    valid_length = jnp.array([5, 8], jnp.int32)   # every row has >= 1 valid key

    fwd = jax.jit(kobert_forward)
    pooled = fwd(params, input_ids, valid_length, token_type_ids)
    pooled = jax.block_until_ready(pooled)
    assert pooled.shape == (B, H) and pooled.dtype == jnp.float32
    print("KERNEL_OK")
</pallas_src>

<mosaic_0001>
module attributes {stable_mosaic.version = 11 : i64} {
  func.func @fused_bert_kernel(%arg0: i32, %arg1: memref<2xi32, #tpu.memory_space<smem>>, %arg2: memref<16x32xf32, #tpu.memory_space<vmem>>, %arg3: memref<1x32xf32, #tpu.memory_space<vmem>>, %arg4: memref<1x32xf32, #tpu.memory_space<vmem>>, %arg5: memref<1x32x96xf32, #tpu.memory_space<vmem>>, %arg6: memref<1x1x96xf32, #tpu.memory_space<vmem>>, %arg7: memref<1x32x32xf32, #tpu.memory_space<vmem>>, %arg8: memref<1x1x32xf32, #tpu.memory_space<vmem>>, %arg9: memref<1x1x32xf32, #tpu.memory_space<vmem>>, %arg10: memref<1x1x32xf32, #tpu.memory_space<vmem>>, %arg11: memref<1x32x64xf32, #tpu.memory_space<vmem>>, %arg12: memref<1x1x64xf32, #tpu.memory_space<vmem>>, %arg13: memref<1x64x32xf32, #tpu.memory_space<vmem>>, %arg14: memref<1x1x32xf32, #tpu.memory_space<vmem>>, %arg15: memref<1x1x32xf32, #tpu.memory_space<vmem>>, %arg16: memref<1x1x32xf32, #tpu.memory_space<vmem>>, %arg17: memref<32x32xf32, #tpu.memory_space<vmem>>, %arg18: memref<1x32xf32, #tpu.memory_space<vmem>>, %arg19: memref<2x32xf32, #tpu.memory_space<vmem>>, %arg20: memref<16x32xf32, #tpu.memory_space<vmem>>) attributes {dimension_semantics = [#tpu.dimension_semantics<arbitrary>], iteration_bounds = array<i64: 2>, scalar_prefetch = 1 : i64, scratch_operands = 1 : i64, tpu.core_type = #tpu.core_type<tc>, window_params = [{pipeline_mode = #tpu.pipeline_mode<synchronous>, transform_indices = @transform_0, window_bounds = array<i64: 16, 32>}, {pipeline_mode = #tpu.pipeline_mode<synchronous>, transform_indices = @transform_1, window_bounds = array<i64: 1, 32>}, {pipeline_mode = #tpu.pipeline_mode<synchronous>, transform_indices = @transform_2, window_bounds = array<i64: 1, 32>}, {transform_indices = @transform_3, window_bounds = array<i64: 1, 32, 96>}, {transform_indices = @transform_4, window_bounds = array<i64: 1, 1, 96>}, {transform_indices = @transform_5, window_bounds = array<i64: 1, 32, 32>}, {transform_indices = @transform_6, window_bounds = array<i64: 1, 1, 32>}, {transform_indices = @transform_7, window_bounds = array<i64: 1, 1, 32>}, {transform_indices = @transform_8, window_bounds = array<i64: 1, 1, 32>}, {transform_indices = @transform_9, window_bounds = array<i64: 1, 32, 64>}, {transform_indices = @transform_10, window_bounds = array<i64: 1, 1, 64>}, {transform_indices = @transform_11, window_bounds = array<i64: 1, 64, 32>}, {transform_indices = @transform_12, window_bounds = array<i64: 1, 1, 32>}, {transform_indices = @transform_13, window_bounds = array<i64: 1, 1, 32>}, {transform_indices = @transform_14, window_bounds = array<i64: 1, 1, 32>}, {pipeline_mode = #tpu.pipeline_mode<synchronous>, transform_indices = @transform_15, window_bounds = array<i64: 32, 32>}, {pipeline_mode = #tpu.pipeline_mode<synchronous>, transform_indices = @transform_16, window_bounds = array<i64: 1, 32>}, {pipeline_mode = #tpu.pipeline_mode<synchronous>, transform_indices = @transform_17, window_bounds = array<i64: 2, 32>}]} {
    %c0_i32 = arith.constant 0 : i32
    %0 = arith.cmpi eq, %arg0, %c0_i32 : i32
    %1 = arith.extui %0 : i1 to i32
    %c0_i32_0 = arith.constant 0 : i32
    %2 = arith.cmpi ne, %1, %c0_i32_0 : i32
    scf.if %2 {
      %c0_73 = arith.constant 0 : index
      %c0_74 = arith.constant 0 : index
      %166 = vector.load %arg2[%c0_73, %c0_74] : memref<16x32xf32, #tpu.memory_space<vmem>>, vector<16x32xf32>
      %c0_75 = arith.constant 0 : index
      %c0_76 = arith.constant 0 : index
      %167 = vector.load %arg3[%c0_75, %c0_76] : memref<1x32xf32, #tpu.memory_space<vmem>>, vector<1x32xf32>
      %c0_77 = arith.constant 0 : index
      %c0_78 = arith.constant 0 : index
      %168 = vector.load %arg4[%c0_77, %c0_78] : memref<1x32xf32, #tpu.memory_space<vmem>>, vector<1x32xf32>
      %cst_79 = arith.constant dense<0.000000e+00> : vector<16xf32>
      %169 = vector.multi_reduction <add>, %166, %cst_79 [1] : vector<16x32xf32> to vector<16xf32>
      %170 = vector.shape_cast %169 : vector<16xf32> to vector<16x1xf32>
      %cst_80 = arith.constant 3.200000e+01 : f32
      %171 = vector.broadcast %cst_80 : f32 to vector<16x1xf32>
      %172 = arith.divf %170, %171 : vector<16x1xf32>
      %173 = vector.broadcast %172 : vector<16x1xf32> to vector<16x32xf32>
      %174 = arith.subf %166, %173 : vector<16x32xf32>
      %175 = arith.mulf %174, %174 : vector<16x32xf32>
      %cst_81 = arith.constant dense<0.000000e+00> : vector<16xf32>
      %176 = vector.multi_reduction <add>, %175, %cst_81 [1] : vector<16x32xf32> to vector<16xf32>
      %177 = vector.shape_cast %176 : vector<16xf32> to vector<16x1xf32>
      %cst_82 = arith.constant 3.200000e+01 : f32
      %178 = vector.broadcast %cst_82 : f32 to vector<16x1xf32>
      %179 = arith.divf %177, %178 : vector<16x1xf32>
      %180 = vector.broadcast %172 : vector<16x1xf32> to vector<16x32xf32>
      %181 = arith.subf %166, %180 : vector<16x32xf32>
      %cst_83 = arith.constant 9.99999996E-13 : f32
      %182 = vector.broadcast %cst_83 : f32 to vector<16x1xf32>
      %183 = arith.addf %179, %182 : vector<16x1xf32>
      %184 = math.rsqrt %183 : vector<16x1xf32>
      %185 = vector.broadcast %184 : vector<16x1xf32> to vector<16x32xf32>
      %186 = arith.mulf %181, %185 : vector<16x32xf32>
      %187 = vector.broadcast %167 : vector<1x32xf32> to vector<16x32xf32>
      %188 = arith.mulf %186, %187 : vector<16x32xf32>
      %189 = vector.broadcast %168 : vector<1x32xf32> to vector<16x32xf32>
      %190 = arith.addf %188, %189 : vector<16x32xf32>
      %c0_84 = arith.constant 0 : index
      %c0_85 = arith.constant 0 : index
      %191 = vector.load %arg20[%c0_84, %c0_85] : memref<16x32xf32, #tpu.memory_space<vmem>>, vector<16x32xf32>
      tpu.vector_store %arg20[%c0_84, %c0_85], %190 {strides = array<i32>} : memref<16x32xf32, #tpu.memory_space<vmem>>, vector<16x32xf32>,
    } else {
    }
    %c0 = arith.constant 0 : index
    %c0_1 = arith.constant 0 : index
    %3 = vector.load %arg20[%c0, %c0_1] : memref<16x32xf32, #tpu.memory_space<vmem>>, vector<16x32xf32>
    %4 = tpu.iota {dimensions = array<i32: 2>} : vector<1x1x8xi32>
    %c0_2 = arith.constant 0 : index
    %5 = memref.load %arg1[%c0_2] : memref<2xi32, #tpu.memory_space<smem>>
    %6 = vector.broadcast %5 : i32 to vector<1x1x8xi32>
    %7 = arith.cmpi slt, %4, %6 : vector<1x1x8xi32>
    %cst = arith.constant 0.000000e+00 : f32
    %cst_3 = arith.constant -1.000000e+09 : f32
    %8 = vector.broadcast %cst : f32 to vector<1x1x8xf32>
    %9 = vector.broadcast %cst_3 : f32 to vector<1x1x8xf32>
    %10 = arith.select %7, %8, %9 : vector<1x1x8xi1>, vector<1x1x8xf32>
    %c1 = arith.constant 1 : index
    %11 = memref.load %arg1[%c1] : memref<2xi32, #tpu.memory_space<smem>>
    %12 = vector.broadcast %11 : i32 to vector<1x1x8xi32>
    %13 = arith.cmpi slt, %4, %12 : vector<1x1x8xi32>
    %cst_4 = arith.constant 0.000000e+00 : f32
    %cst_5 = arith.constant -1.000000e+09 : f32
    %14 = vector.broadcast %cst_4 : f32 to vector<1x1x8xf32>
    %15 = vector.broadcast %cst_5 : f32 to vector<1x1x8xf32>
    %16 = arith.select %13, %14, %15 : vector<1x1x8xi1>, vector<1x1x8xf32>
    %17 = tpu.concatenate %10, %16 in 0 : vector<1x1x8xf32>, vector<1x1x8xf32> -> vector<2x1x8xf32>
    %c0_6 = arith.constant 0 : index
    %c0_7 = arith.constant 0 : index
    %c0_8 = arith.constant 0 : index
    %18 = vector.load %arg5[%c0_6, %c0_7, %c0_8] : memref<1x32x96xf32, #tpu.memory_space<vmem>>, vector<1x32x96xf32>
    %19 = vector.shape_cast %18 : vector<1x32x96xf32> to vector<32x96xf32>
    %cst_9 = arith.constant dense<0.000000e+00> : vector<16x96xf32>
    %20 = tpu.matmul %3, %19, %cst_9 {dimension_numbers = #tpu.dot_dimension_numbers<[1], [0], [0], [1], [0, 0, 1, 1], [], []>} : vector<16x32xf32>, vector<32x96xf32>, vector<16x96xf32> -> vector<16x96xf32>
    %c0_10 = arith.constant 0 : index
    %c0_11 = arith.constant 0 : index
    %c0_12 = arith.constant 0 : index
    %21 = vector.load %arg6[%c0_10, %c0_11, %c0_12] : memref<1x1x96xf32, #tpu.memory_space<vmem>>, vector<1x1x96xf32>
    %22 = vector.shape_cast %21 : vector<1x1x96xf32> to vector<1x96xf32>
    %23 = vector.broadcast %22 : vector<1x96xf32> to vector<16x96xf32>
    %24 = arith.addf %20, %23 : vector<16x96xf32>
    %25 = vector.extract_strided_slice %24 {offsets = [0, 0], sizes = [16, 32], strides = [1, 1]} : vector<16x96xf32> to vector<16x32xf32>
    %26 = vector.extract_strided_slice %24 {offsets = [0, 32], sizes = [16, 32], strides = [1, 1]} : vector<16x96xf32> to vector<16x32xf32>
    %27 = vector.extract_strided_slice %24 {offsets = [0, 64], sizes = [16, 32], strides = [1, 1]} : vector<16x96xf32> to vector<16x32xf32>
    %28 = vector.extract_strided_slice %25 {offsets = [0, 0], sizes = [16, 16], strides = [1, 1]} : vector<16x32xf32> to vector<16x16xf32>
    %29 = vector.shape_cast %28 : vector<16x16xf32> to vector<2x8x16xf32>
    %30 = vector.extract_strided_slice %26 {offsets = [0, 0], sizes = [16, 16], strides = [1, 1]} : vector<16x32xf32> to vector<16x16xf32>
    %31 = vector.shape_cast %30 : vector<16x16xf32> to vector<2x8x16xf32>
    %32 = vector.extract_strided_slice %27 {offsets = [0, 0], sizes = [16, 16], strides = [1, 1]} : vector<16x32xf32> to vector<16x16xf32>
    %33 = vector.shape_cast %32 : vector<16x16xf32> to vector<2x8x16xf32>
    "tpu.trace_start"() <{level = 10 : i32, message = "bqd,bkd->bqk"}> : () -> ()
    %cst_13 = arith.constant dense<0.000000e+00> : vector<2x8x8xf32>
    %34 = tpu.matmul %29, %31, %cst_13 {dimension_numbers = #tpu.dot_dimension_numbers<[2], [2], [1], [1], [0, 0, 0, 1, 1, 1], [0], [0]>} : vector<2x8x16xf32>, vector<2x8x16xf32>, vector<2x8x8xf32> -> vector<2x8x8xf32>
    "tpu.trace_stop"() : () -> ()
    %cst_14 = arith.constant 2.500000e-01 : f32
    %35 = vector.broadcast %cst_14 : f32 to vector<2x8x8xf32>
    %36 = arith.mulf %34, %35 : vector<2x8x8xf32>
    %37 = vector.broadcast %17 : vector<2x1x8xf32> to vector<2x8x8xf32>
    %38 = arith.addf %36, %37 : vector<2x8x8xf32>
    %cst_15 = arith.constant dense<0xFF800000> : vector<2x8xf32>
    %39 = vector.multi_reduction <maximumf>, %38, %cst_15 [2] : vector<2x8x8xf32> to vector<2x8xf32>
    %40 = vector.shape_cast %39 : vector<2x8xf32> to vector<2x8x1xf32>
    %41 = vector.broadcast %40 : vector<2x8x1xf32> to vector<2x8x8xf32>
    %42 = arith.subf %38, %41 : vector<2x8x8xf32>
    %43 = math.exp %42 : vector<2x8x8xf32>
    %cst_16 = arith.constant dense<0.000000e+00> : vector<2x8xf32>
    %44 = vector.multi_reduction <add>, %43, %cst_16 [2] : vector<2x8x8xf32> to vector<2x8xf32>
    %45 = vector.shape_cast %44 : vector<2x8xf32> to vector<2x8x1xf32>
    %46 = tpu.reciprocal %45 {approx = true} : vector<2x8x1xf32> -> vector<2x8x1xf32>
    %47 = vector.broadcast %46 : vector<2x8x1xf32> to vector<2x8x8xf32>
    %48 = arith.mulf %43, %47 : vector<2x8x8xf32>
    "tpu.trace_start"() <{level = 10 : i32, message = "bqk,bkd->bqd"}> : () -> ()
    %cst_17 = arith.constant dense<0.000000e+00> : vector<2x8x16xf32>
    %49 = tpu.matmul %48, %33, %cst_17 {dimension_numbers = #tpu.dot_dimension_numbers<[2], [1], [1], [2], [0, 0, 0, 1, 1, 2], [0], [0]>} : vector<2x8x8xf32>, vector<2x8x16xf32>, vector<2x8x16xf32> -> vector<2x8x16xf32>
    "tpu.trace_stop"() : () -> ()
    %50 = vector.extract_strided_slice %25 {offsets = [0, 16], sizes = [16, 16], strides = [1, 1]} : vector<16x32xf32> to vector<16x16xf32>
    %51 = vector.shape_cast %50 : vector<16x16xf32> to vector<2x8x16xf32>
    %52 = vector.extract_strided_slice %26 {offsets = [0, 16], sizes = [16, 16], strides = [1, 1]} : vector<16x32xf32> to vector<16x16xf32>
    %53 = vector.shape_cast %52 : vector<16x16xf32> to vector<2x8x16xf32>
    %54 = vector.extract_strided_slice %27 {offsets = [0, 16], sizes = [16, 16], strides = [1, 1]} : vector<16x32xf32> to vector<16x16xf32>
    %55 = vector.shape_cast %54 : vector<16x16xf32> to vector<2x8x16xf32>
    "tpu.trace_start"() <{level = 10 : i32, message = "bqd,bkd->bqk"}> : () -> ()
    %cst_18 = arith.constant dense<0.000000e+00> : vector<2x8x8xf32>
    %56 = tpu.matmul %51, %53, %cst_18 {dimension_numbers = #tpu.dot_dimension_numbers<[2], [2], [1], [1], [0, 0, 0, 1, 1, 1], [0], [0]>} : vector<2x8x16xf32>, vector<2x8x16xf32>, vector<2x8x8xf32> -> vector<2x8x8xf32>
    "tpu.trace_stop"() : () -> ()
    %cst_19 = arith.constant 2.500000e-01 : f32
    %57 = vector.broadcast %cst_19 : f32 to vector<2x8x8xf32>
    %58 = arith.mulf %56, %57 : vector<2x8x8xf32>
    %59 = vector.broadcast %17 : vector<2x1x8xf32> to vector<2x8x8xf32>
    %60 = arith.addf %58, %59 : vector<2x8x8xf32>
    %cst_20 = arith.constant dense<0xFF800000> : vector<2x8xf32>
    %61 = vector.multi_reduction <maximumf>, %60, %cst_20 [2] : vector<2x8x8xf32> to vector<2x8xf32>
    %62 = vector.shape_cast %61 : vector<2x8xf32> to vector<2x8x1xf32>
    %63 = vector.broadcast %62 : vector<2x8x1xf32> to vector<2x8x8xf32>
    %64 = arith.subf %60, %63 : vector<2x8x8xf32>
    %65 = math.exp %64 : vector<2x8x8xf32>
    %cst_21 = arith.constant dense<0.000000e+00> : vector<2x8xf32>
    %66 = vector.multi_reduction <add>, %65, %cst_21 [2] : vector<2x8x8xf32> to vector<2x8xf32>
    %67 = vector.shape_cast %66 : vector<2x8xf32> to vector<2x8x1xf32>
    %68 = tpu.reciprocal %67 {approx = true} : vector<2x8x1xf32> -> vector<2x8x1xf32>
    %69 = vector.broadcast %68 : vector<2x8x1xf32> to vector<2x8x8xf32>
    %70 = arith.mulf %65, %69 : vector<2x8x8xf32>
    "tpu.trace_start"() <{level = 10 : i32, message = "bqk,bkd->bqd"}> : () -> ()
    %cst_22 = arith.constant dense<0.000000e+00> : vector<2x8x16xf32>
    %71 = tpu.matmul %70, %55, %cst_22 {dimension_numbers = #tpu.dot_dimension_numbers<[2], [1], [1], [2], [0, 0, 0, 1, 1, 2], [0], [0]>} : vector<2x8x8xf32>, vector<2x8x16xf32>, vector<2x8x16xf32> -> vector<2x8x16xf32>
    "tpu.trace_stop"() : () -> ()
    %72 = tpu.concatenate %49, %71 in 2 : vector<2x8x16xf32>, vector<2x8x16xf32> -> vector<2x8x32xf32>
    %73 = vector.shape_cast %72 : vector<2x8x32xf32> to vector<16x32xf32>
    %c0_23 = arith.constant 0 : index
    %c0_24 = arith.constant 0 : index
    %c0_25 = arith.constant 0 : index
    %74 = vector.load %arg7[%c0_23, %c0_24, %c0_25] : memref<1x32x32xf32, #tpu.memory_space<vmem>>, vector<1x32x32xf32>
    %75 = vector.shape_cast %74 : vector<1x32x32xf32> to vector<32x32xf32>
    %cst_26 = arith.constant dense<0.000000e+00> : vector<16x32xf32>
    %76 = tpu.matmul %73, %75, %cst_26 {dimension_numbers = #tpu.dot_dimension_numbers<[1], [0], [0], [1], [0, 0, 1, 1], [], []>} : vector<16x32xf32>, vector<32x32xf32>, vector<16x32xf32> -> vector<16x32xf32>
    %c0_27 = arith.constant 0 : index
    %c0_28 = arith.constant 0 : index
    %c0_29 = arith.constant 0 : index
    %77 = vector.load %arg8[%c0_27, %c0_28, %c0_29] : memref<1x1x32xf32, #tpu.memory_space<vmem>>, vector<1x1x32xf32>
    %78 = vector.shape_cast %77 : vector<1x1x32xf32> to vector<1x32xf32>
    %79 = vector.broadcast %78 : vector<1x32xf32> to vector<16x32xf32>
    %80 = arith.addf %76, %79 : vector<16x32xf32>
    %81 = arith.addf %3, %80 : vector<16x32xf32>
    %c0_30 = arith.constant 0 : index
    %c0_31 = arith.constant 0 : index
    %c0_32 = arith.constant 0 : index
    %82 = vector.load %arg9[%c0_30, %c0_31, %c0_32] : memref<1x1x32xf32, #tpu.memory_space<vmem>>, vector<1x1x32xf32>
    %83 = vector.shape_cast %82 : vector<1x1x32xf32> to vector<1x32xf32>
    %c0_33 = arith.constant 0 : index
    %c0_34 = arith.constant 0 : index
    %c0_35 = arith.constant 0 : index
    %84 = vector.load %arg10[%c0_33, %c0_34, %c0_35] : memref<1x1x32xf32, #tpu.memory_space<vmem>>, vector<1x1x32xf32>
    %85 = vector.shape_cast %84 : vector<1x1x32xf32> to vector<1x32xf32>
    %cst_36 = arith.constant dense<0.000000e+00> : vector<16xf32>
    %86 = vector.multi_reduction <add>, %81, %cst_36 [1] : vector<16x32xf32> to vector<16xf32>
    %87 = vector.shape_cast %86 : vector<16xf32> to vector<16x1xf32>
    %cst_37 = arith.constant 3.200000e+01 : f32
    %88 = vector.broadcast %cst_37 : f32 to vector<16x1xf32>
    %89 = arith.divf %87, %88 : vector<16x1xf32>
    %90 = vector.broadcast %89 : vector<16x1xf32> to vector<16x32xf32>
    %91 = arith.subf %81, %90 : vector<16x32xf32>
    %92 = arith.mulf %91, %91 : vector<16x32xf32>
    %cst_38 = arith.constant dense<0.000000e+00> : vector<16xf32>
    %93 = vector.multi_reduction <add>, %92, %cst_38 [1] : vector<16x32xf32> to vector<16xf32>
    %94 = vector.shape_cast %93 : vector<16xf32> to vector<16x1xf32>
    %cst_39 = arith.constant 3.200000e+01 : f32
    %95 = vector.broadcast %cst_39 : f32 to vector<16x1xf32>
    %96 = arith.divf %94, %95 : vector<16x1xf32>
    %97 = vector.broadcast %89 : vector<16x1xf32> to vector<16x32xf32>
    %98 = arith.subf %81, %97 : vector<16x32xf32>
    %cst_40 = arith.constant 9.99999996E-13 : f32
    %99 = vector.broadcast %cst_40 : f32 to vector<16x1xf32>
    %100 = arith.addf %96, %99 : vector<16x1xf32>
    %101 = math.rsqrt %100 : vector<16x1xf32>
    %102 = vector.broadcast %101 : vector<16x1xf32> to vector<16x32xf32>
    %103 = arith.mulf %98, %102 : vector<16x32xf32>
    %104 = vector.broadcast %83 : vector<1x32xf32> to vector<16x32xf32>
    %105 = arith.mulf %103, %104 : vector<16x32xf32>
    %106 = vector.broadcast %85 : vector<1x32xf32> to vector<16x32xf32>
    %107 = arith.addf %105, %106 : vector<16x32xf32>
    %c0_41 = arith.constant 0 : index
    %c0_42 = arith.constant 0 : index
    %c0_43 = arith.constant 0 : index
    %108 = vector.load %arg11[%c0_41, %c0_42, %c0_43] : memref<1x32x64xf32, #tpu.memory_space<vmem>>, vector<1x32x64xf32>
    %109 = vector.shape_cast %108 : vector<1x32x64xf32> to vector<32x64xf32>
    %cst_44 = arith.constant dense<0.000000e+00> : vector<16x64xf32>
    %110 = tpu.matmul %107, %109, %cst_44 {dimension_numbers = #tpu.dot_dimension_numbers<[1], [0], [0], [1], [0, 0, 1, 1], [], []>} : vector<16x32xf32>, vector<32x64xf32>, vector<16x64xf32> -> vector<16x64xf32>
    %c0_45 = arith.constant 0 : index
    %c0_46 = arith.constant 0 : index
    %c0_47 = arith.constant 0 : index
    %111 = vector.load %arg12[%c0_45, %c0_46, %c0_47] : memref<1x1x64xf32, #tpu.memory_space<vmem>>, vector<1x1x64xf32>
    %112 = vector.shape_cast %111 : vector<1x1x64xf32> to vector<1x64xf32>
    %113 = vector.broadcast %112 : vector<1x64xf32> to vector<16x64xf32>
    %114 = arith.addf %110, %113 : vector<16x64xf32>
    %115 = arith.mulf %114, %114 : vector<16x64xf32>
    %116 = arith.mulf %114, %115 : vector<16x64xf32>
    %cst_48 = arith.constant 4.471500e-02 : f32
    %117 = vector.broadcast %cst_48 : f32 to vector<16x64xf32>
    %118 = arith.mulf %117, %116 : vector<16x64xf32>
    %119 = arith.addf %114, %118 : vector<16x64xf32>
    %cst_49 = arith.constant 0.797884583 : f32
    %120 = vector.broadcast %cst_49 : f32 to vector<16x64xf32>
    %121 = arith.mulf %120, %119 : vector<16x64xf32>
    %122 = math.tanh %121 : vector<16x64xf32>
    %cst_50 = arith.constant 1.000000e+00 : f32
    %123 = vector.broadcast %cst_50 : f32 to vector<16x64xf32>
    %124 = arith.addf %123, %122 : vector<16x64xf32>
    %cst_51 = arith.constant 5.000000e-01 : f32
    %125 = vector.broadcast %cst_51 : f32 to vector<16x64xf32>
    %126 = arith.mulf %125, %124 : vector<16x64xf32>
    %127 = arith.mulf %114, %126 : vector<16x64xf32>
    %c0_52 = arith.constant 0 : index
    %c0_53 = arith.constant 0 : index
    %c0_54 = arith.constant 0 : index
    %128 = vector.load %arg13[%c0_52, %c0_53, %c0_54] : memref<1x64x32xf32, #tpu.memory_space<vmem>>, vector<1x64x32xf32>
    %129 = vector.shape_cast %128 : vector<1x64x32xf32> to vector<64x32xf32>
    %cst_55 = arith.constant dense<0.000000e+00> : vector<16x32xf32>
    %130 = tpu.matmul %127, %129, %cst_55 {dimension_numbers = #tpu.dot_dimension_numbers<[1], [0], [0], [1], [0, 0, 1, 1], [], []>} : vector<16x64xf32>, vector<64x32xf32>, vector<16x32xf32> -> vector<16x32xf32>
    %c0_56 = arith.constant 0 : index
    %c0_57 = arith.constant 0 : index
    %c0_58 = arith.constant 0 : index
    %131 = vector.load %arg14[%c0_56, %c0_57, %c0_58] : memref<1x1x32xf32, #tpu.memory_space<vmem>>, vector<1x1x32xf32>
    %132 = vector.shape_cast %131 : vector<1x1x32xf32> to vector<1x32xf32>
    %133 = vector.broadcast %132 : vector<1x32xf32> to vector<16x32xf32>
    %134 = arith.addf %130, %133 : vector<16x32xf32>
    %135 = arith.addf %107, %134 : vector<16x32xf32>
    %c0_59 = arith.constant 0 : index
    %c0_60 = arith.constant 0 : index
    %c0_61 = arith.constant 0 : index
    %136 = vector.load %arg15[%c0_59, %c0_60, %c0_61] : memref<1x1x32xf32, #tpu.memory_space<vmem>>, vector<1x1x32xf32>
    %137 = vector.shape_cast %136 : vector<1x1x32xf32> to vector<1x32xf32>
    %c0_62 = arith.constant 0 : index
    %c0_63 = arith.constant 0 : index
    %c0_64 = arith.constant 0 : index
    %138 = vector.load %arg16[%c0_62, %c0_63, %c0_64] : memref<1x1x32xf32, #tpu.memory_space<vmem>>, vector<1x1x32xf32>
    %139 = vector.shape_cast %138 : vector<1x1x32xf32> to vector<1x32xf32>
    %cst_65 = arith.constant dense<0.000000e+00> : vector<16xf32>
    %140 = vector.multi_reduction <add>, %135, %cst_65 [1] : vector<16x32xf32> to vector<16xf32>
    %141 = vector.shape_cast %140 : vector<16xf32> to vector<16x1xf32>
    %cst_66 = arith.constant 3.200000e+01 : f32
    %142 = vector.broadcast %cst_66 : f32 to vector<16x1xf32>
    %143 = arith.divf %141, %142 : vector<16x1xf32>
    %144 = vector.broadcast %143 : vector<16x1xf32> to vector<16x32xf32>
    %145 = arith.subf %135, %144 : vector<16x32xf32>
    %146 = arith.mulf %145, %145 : vector<16x32xf32>
    %cst_67 = arith.constant dense<0.000000e+00> : vector<16xf32>
    %147 = vector.multi_reduction <add>, %146, %cst_67 [1] : vector<16x32xf32> to vector<16xf32>
    %148 = vector.shape_cast %147 : vector<16xf32> to vector<16x1xf32>
    %cst_68 = arith.constant 3.200000e+01 : f32
    %149 = vector.broadcast %cst_68 : f32 to vector<16x1xf32>
    %150 = arith.divf %148, %149 : vector<16x1xf32>
    %151 = vector.broadcast %143 : vector<16x1xf32> to vector<16x32xf32>
    %152 = arith.subf %135, %151 : vector<16x32xf32>
    %cst_69 = arith.constant 9.99999996E-13 : f32
    %153 = vector.broadcast %cst_69 : f32 to vector<16x1xf32>
    %154 = arith.addf %150, %153 : vector<16x1xf32>
    %155 = math.rsqrt %154 : vector<16x1xf32>
    %156 = vector.broadcast %155 : vector<16x1xf32> to vector<16x32xf32>
    %157 = arith.mulf %152, %156 : vector<16x32xf32>
    %158 = vector.broadcast %137 : vector<1x32xf32> to vector<16x32xf32>
    %159 = arith.mulf %157, %158 : vector<16x32xf32>
    %160 = vector.broadcast %139 : vector<1x32xf32> to vector<16x32xf32>
    %161 = arith.addf %159, %160 : vector<16x32xf32>
    %c0_70 = arith.constant 0 : index
    %c0_71 = arith.constant 0 : index
    %162 = vector.load %arg20[%c0_70, %c0_71] : memref<16x32xf32, #tpu.memory_space<vmem>>, vector<16x32xf32>
    tpu.vector_store %arg20[%c0_70, %c0_71], %161 {strides = array<i32>} : memref<16x32xf32, #tpu.memory_space<vmem>>, vector<16x32xf32>,
    %c1_i32 = arith.constant 1 : i32
    %163 = arith.cmpi eq, %arg0, %c1_i32 : i32
    %164 = arith.extui %163 : i1 to i32
    %c0_i32_72 = arith.constant 0 : i32
    %165 = arith.cmpi ne, %164, %c0_i32_72 : i32
    scf.if %165 {
      %166 = vector.extract_strided_slice %161 {offsets = [0, 0], sizes = [1, 32], strides = [1, 1]} : vector<16x32xf32> to vector<1x32xf32>
      %167 = vector.extract_strided_slice %161 {offsets = [8, 0], sizes = [1, 32], strides = [1, 1]} : vector<16x32xf32> to vector<1x32xf32>
      %168 = tpu.concatenate %166, %167 in 0 : vector<1x32xf32>, vector<1x32xf32> -> vector<2x32xf32>
      %c0_73 = arith.constant 0 : index
      %c0_74 = arith.constant 0 : index
      %169 = vector.load %arg17[%c0_73, %c0_74] : memref<32x32xf32, #tpu.memory_space<vmem>>, vector<32x32xf32>
      %cst_75 = arith.constant dense<0.000000e+00> : vector<2x32xf32>
      %170 = tpu.matmul %168, %169, %cst_75 {dimension_numbers = #tpu.dot_dimension_numbers<[1], [0], [0], [1], [0, 0, 1, 1], [], []>} : vector<2x32xf32>, vector<32x32xf32>, vector<2x32xf32> -> vector<2x32xf32>
      %c0_76 = arith.constant 0 : index
      %c0_77 = arith.constant 0 : index
      %171 = vector.load %arg18[%c0_76, %c0_77] : memref<1x32xf32, #tpu.memory_space<vmem>>, vector<1x32xf32>
      %172 = vector.broadcast %171 : vector<1x32xf32> to vector<2x32xf32>
      %173 = arith.addf %170, %172 : vector<2x32xf32>
      %174 = math.tanh %173 : vector<2x32xf32>
      %c0_78 = arith.constant 0 : index
      %c0_79 = arith.constant 0 : index
      %175 = vector.load %arg19[%c0_78, %c0_79] : memref<2x32xf32, #tpu.memory_space<vmem>>, vector<2x32xf32>
      tpu.vector_store %arg19[%c0_78, %c0_79], %174 {strides = array<i32>} : memref<2x32xf32, #tpu.memory_space<vmem>>, vector<2x32xf32>,
    } else {
    }
    return
  }
  func.func @transform_0(%arg0: i32, %arg1: memref<2xi32, #tpu.memory_space<smem>>) -> (i32, i32) {
    %c0_i32 = arith.constant 0 : i32
    %c0_i32_0 = arith.constant 0 : i32
    %c0_i32_1 = arith.constant 0 : i32
    return %c0_i32, %c0_i32_0 : i32, i32
  }
  func.func @transform_1(%arg0: i32, %arg1: memref<2xi32, #tpu.memory_space<smem>>) -> (i32, i32) {
    %c0_i32 = arith.constant 0 : i32
    %c0_i32_0 = arith.constant 0 : i32
    %c0_i32_1 = arith.constant 0 : i32
    return %c0_i32, %c0_i32_0 : i32, i32
  }
  func.func @transform_2(%arg0: i32, %arg1: memref<2xi32, #tpu.memory_space<smem>>) -> (i32, i32) {
    %c0_i32 = arith.constant 0 : i32
    %c0_i32_0 = arith.constant 0 : i32
    %c0_i32_1 = arith.constant 0 : i32
    return %c0_i32, %c0_i32_0 : i32, i32
  }
  func.func @transform_3(%arg0: i32, %arg1: memref<2xi32, #tpu.memory_space<smem>>) -> (i32, i32, i32) {
    %c0_i32 = arith.constant 0 : i32
    %c0_i32_0 = arith.constant 0 : i32
    %c0_i32_1 = arith.constant 0 : i32
    return %arg0, %c0_i32, %c0_i32_0 : i32, i32, i32
  }
  func.func @transform_4(%arg0: i32, %arg1: memref<2xi32, #tpu.memory_space<smem>>) -> (i32, i32, i32) {
    %c0_i32 = arith.constant 0 : i32
    %c0_i32_0 = arith.constant 0 : i32
    %c0_i32_1 = arith.constant 0 : i32
    return %arg0, %c0_i32, %c0_i32_0 : i32, i32, i32
  }
  func.func @transform_5(%arg0: i32, %arg1: memref<2xi32, #tpu.memory_space<smem>>) -> (i32, i32, i32) {
    %c0_i32 = arith.constant 0 : i32
    %c0_i32_0 = arith.constant 0 : i32
    %c0_i32_1 = arith.constant 0 : i32
    return %arg0, %c0_i32, %c0_i32_0 : i32, i32, i32
  }
  func.func @transform_6(%arg0: i32, %arg1: memref<2xi32, #tpu.memory_space<smem>>) -> (i32, i32, i32) {
    %c0_i32 = arith.constant 0 : i32
    %c0_i32_0 = arith.constant 0 : i32
    %c0_i32_1 = arith.constant 0 : i32
    return %arg0, %c0_i32, %c0_i32_0 : i32, i32, i32
  }
  func.func @transform_7(%arg0: i32, %arg1: memref<2xi32, #tpu.memory_space<smem>>) -> (i32, i32, i32) {
    %c0_i32 = arith.constant 0 : i32
    %c0_i32_0 = arith.constant 0 : i32
    %c0_i32_1 = arith.constant 0 : i32
    return %arg0, %c0_i32, %c0_i32_0 : i32, i32, i32
  }
  func.func @transform_8(%arg0: i32, %arg1: memref<2xi32, #tpu.memory_space<smem>>) -> (i32, i32, i32) {
    %c0_i32 = arith.constant 0 : i32
    %c0_i32_0 = arith.constant 0 : i32
    %c0_i32_1 = arith.constant 0 : i32
    return %arg0, %c0_i32, %c0_i32_0 : i32, i32, i32
  }
  func.func @transform_9(%arg0: i32, %arg1: memref<2xi32, #tpu.memory_space<smem>>) -> (i32, i32, i32) {
    %c0_i32 = arith.constant 0 : i32
    %c0_i32_0 = arith.constant 0 : i32
    %c0_i32_1 = arith.constant 0 : i32
    return %arg0, %c0_i32, %c0_i32_0 : i32, i32, i32
  }
  func.func @transform_10(%arg0: i32, %arg1: memref<2xi32, #tpu.memory_space<smem>>) -> (i32, i32, i32) {
    %c0_i32 = arith.constant 0 : i32
    %c0_i32_0 = arith.constant 0 : i32
    %c0_i32_1 = arith.constant 0 : i32
    return %arg0, %c0_i32, %c0_i32_0 : i32, i32, i32
  }
  func.func @transform_11(%arg0: i32, %arg1: memref<2xi32, #tpu.memory_space<smem>>) -> (i32, i32, i32) {
    %c0_i32 = arith.constant 0 : i32
    %c0_i32_0 = arith.constant 0 : i32
    %c0_i32_1 = arith.constant 0 : i32
    return %arg0, %c0_i32, %c0_i32_0 : i32, i32, i32
  }
  func.func @transform_12(%arg0: i32, %arg1: memref<2xi32, #tpu.memory_space<smem>>) -> (i32, i32, i32) {
    %c0_i32 = arith.constant 0 : i32
    %c0_i32_0 = arith.constant 0 : i32
    %c0_i32_1 = arith.constant 0 : i32
    return %arg0, %c0_i32, %c0_i32_0 : i32, i32, i32
  }
  func.func @transform_13(%arg0: i32, %arg1: memref<2xi32, #tpu.memory_space<smem>>) -> (i32, i32, i32) {
    %c0_i32 = arith.constant 0 : i32
    %c0_i32_0 = arith.constant 0 : i32
    %c0_i32_1 = arith.constant 0 : i32
    return %arg0, %c0_i32, %c0_i32_0 : i32, i32, i32
  }
  func.func @transform_14(%arg0: i32, %arg1: memref<2xi32, #tpu.memory_space<smem>>) -> (i32, i32, i32) {
    %c0_i32 = arith.constant 0 : i32
    %c0_i32_0 = arith.constant 0 : i32
    %c0_i32_1 = arith.constant 0 : i32
    return %arg0, %c0_i32, %c0_i32_0 : i32, i32, i32
  }
  func.func @transform_15(%arg0: i32, %arg1: memref<2xi32, #tpu.memory_space<smem>>) -> (i32, i32) {
    %c0_i32 = arith.constant 0 : i32
    %c0_i32_0 = arith.constant 0 : i32
    %c0_i32_1 = arith.constant 0 : i32
    return %c0_i32, %c0_i32_0 : i32, i32
  }
  func.func @transform_16(%arg0: i32, %arg1: memref<2xi32, #tpu.memory_space<smem>>) -> (i32, i32) {
    %c0_i32 = arith.constant 0 : i32
    %c0_i32_0 = arith.constant 0 : i32
    %c0_i32_1 = arith.constant 0 : i32
    return %c0_i32, %c0_i32_0 : i32, i32
  }
  func.func @transform_17(%arg0: i32, %arg1: memref<2xi32, #tpu.memory_space<smem>>) -> (i32, i32) {
    %c0_i32 = arith.constant 0 : i32
    %c0_i32_0 = arith.constant 0 : i32
    %c0_i32_1 = arith.constant 0 : i32
    return %c0_i32, %c0_i32_0 : i32, i32
  }
}

</mosaic_0001>

<llo_original>
// kernel: kobert_forward.1
$region0: #{kobert_forward.1}
  #allocation0 [shape = 'u32[]', space=smem, size = 0x4, offset = 0x4, fixed_abs, tag = 'smem constant byte address 0x4 - core index']
  #allocation1 [shape = 'u32[144,128]{1,0:T(1,128)}', space=vmem, size = 0x12000, scoped, tag = 'internal scratch']
  #allocation2 [shape = 'f32[16,32]{1,0:T(8,128)}', space=vmem, size = 0x2000, scoped, tag = 'scratch operand']
  #allocation3 [shape = 's32[1]{0}', space=sflag, size = 0x4, scoped, tag = 'scoped memory for kobert_forward.1']
  #allocation4 [shape = 'u8[512]{0}', space=smem, size = 0x200, scoped, tag = 'prefetched SMEM operand 0']
  %s0 = inlined_call_operand.vmem [shape: s32[2], index: 0, kind: input, shape index: {}]
  %s1 = inlined_call_operand.vmem [shape: f32[16,32], index: 1, kind: input, shape index: {}]
  %s2 = inlined_call_operand.vmem [shape: f32[1,32], index: 2, kind: input, shape index: {}]
  %s3 = inlined_call_operand.vmem [shape: f32[1,32], index: 3, kind: input, shape index: {}]
  %s4 = inlined_call_operand.vmem [shape: f32[2,32,96], index: 4, kind: input, shape index: {}]
  %s5 = inlined_call_operand.vmem [shape: f32[2,1,96], index: 5, kind: input, shape index: {}]
  %s6 = inlined_call_operand.vmem [shape: f32[2,32,32], index: 6, kind: input, shape index: {}]
  %s7 = inlined_call_operand.vmem [shape: f32[2,1,32], index: 7, kind: input, shape index: {}]
  %s8 = inlined_call_operand.vmem [shape: f32[2,1,32], index: 8, kind: input, shape index: {}]
  %s9 = inlined_call_operand.vmem [shape: f32[2,1,32], index: 9, kind: input, shape index: {}]
  %s10 = inlined_call_operand.vmem [shape: f32[2,32,64], index: 10, kind: input, shape index: {}]
  %s11 = inlined_call_operand.vmem [shape: f32[2,1,64], index: 11, kind: input, shape index: {}]
  %s12 = inlined_call_operand.vmem [shape: f32[2,64,32], index: 12, kind: input, shape index: {}]
  %s13 = inlined_call_operand.vmem [shape: f32[2,1,32], index: 13, kind: input, shape index: {}]
  %s14 = inlined_call_operand.vmem [shape: f32[2,1,32], index: 14, kind: input, shape index: {}]
  %s15 = inlined_call_operand.vmem [shape: f32[2,1,32], index: 15, kind: input, shape index: {}]
  %s16 = inlined_call_operand.vmem [shape: f32[32,32], index: 16, kind: input, shape index: {}]
  %s17 = inlined_call_operand.vmem [shape: f32[1,32], index: 17, kind: input, shape index: {}]
  %s18 = inlined_call_operand.hbm [shape: f32[2,32], index: 18, kind: output, shape index: {}]
  %s19 = sld [smem:[#allocation0]]
  $region109: #{kobert_forward.1} parent=0
    _
  %s21 = ssub.s32 1, %s19
  %s22 = scalar_select 0, %s21, %s19
  %s23 = sshll.u32 %s0, 4
  %s24 = int_to_ptr.vmem [resolvable:$true] %s23
  %26 = dma.vmem_to_smem %s24, 16, [#allocation4], [#allocation3]
  %27 = dma.done [#allocation3], 16
  %28 = sfence
  $region1: #{kobert_forward.1} parent=0
    #allocation5 [shape = 'u8[1024]{0}', space=vmem, size = 0x400, scoped, tag = 'output window, operand 0, single buffered']
    #allocation6 [shape = 's32[2]{0}', space=sflag, size = 0x8, scoped, tag = 'scoped memory for kobert_forward.1']
    %29 = vsyncpa [#allocation6], 0
    loop: start=0, step=1, limit=4
    $region2: #{kobert_forward.1} parent=1 // loop_pre_header
      _
    $region3: #{kobert_forward.1} parent=1 // loop_header
      %s31 = sphi 0, %s35
      %p32 = scmp.ge.s32.totalorder %s31, 4
      %s39 = sphi 0, %s39
      %s41 = sphi 0, %s39
      %s42 = sphi 0, %s41
      %s56 = sphi 0, %s42
      %s60 = sphi 0, %s60
      %s62 = sphi 0, %s60
      %s63 = sphi 0, %s62
      %s77 = sphi 0, %s63
      %s81 = sphi 0, %s81
      %s83 = sphi 0, %s81
      %s84 = sphi 0, %s83
      %s98 = sphi 0, %s84
      %s104 = sphi 0, %s106
      %s107 = sphi 0, %s104
      %s108 = sphi 0, %s107
      %s124 = sphi 0, %s108
      %s130 = sphi 0, %s132
      %s133 = sphi 0, %s130
      %s134 = sphi 0, %s133
      %s150 = sphi 0, %s134
      %s156 = sphi 0, %s158
      %s159 = sphi 0, %s156
      %s160 = sphi 0, %s159
      %s176 = sphi 0, %s160
      %s182 = sphi 0, %s184
      %s185 = sphi 0, %s182
      %s186 = sphi 0, %s185
      %s202 = sphi 0, %s186
      %s208 = sphi 0, %s210
      %s211 = sphi 0, %s208
      %s212 = sphi 0, %s211
      %s228 = sphi 0, %s212
      %s234 = sphi 0, %s236
      %s237 = sphi 0, %s234
      %s238 = sphi 0, %s237
      %s254 = sphi 0, %s238
      %s260 = sphi 0, %s262
      %s263 = sphi 0, %s260
      %s264 = sphi 0, %s263
      %s280 = sphi 0, %s264
      %s286 = sphi 0, %s288
      %s289 = sphi 0, %s286
      %s290 = sphi 0, %s289
      %s306 = sphi 0, %s290
      %s312 = sphi 0, %s314
      %s315 = sphi 0, %s312
      %s316 = sphi 0, %s315
      %s332 = sphi 0, %s316
      %s338 = sphi 0, %s340
      %s341 = sphi 0, %s338
      %s342 = sphi 0, %s341
      %s358 = sphi 0, %s342
      %s364 = sphi 0, %s366
      %s367 = sphi 0, %s364
      %s368 = sphi 0, %s367
      %s384 = sphi 0, %s368
      %s390 = sphi 0, %s392
      %s393 = sphi 0, %s390
      %s394 = sphi 0, %s393
      %s410 = sphi 0, %s394
      %s414 = sphi 0, %s414
      %s416 = sphi 0, %s414
      %s417 = sphi 0, %s416
      %s431 = sphi 0, %s417
      %s435 = sphi 0, %s435
      %s437 = sphi 0, %s435
      %s438 = sphi 0, %s437
      %s452 = sphi 0, %s438
      %s456 = sphi 0, %s456
      %s458 = sphi 0, %s456
      %s459 = sphi 0, %s458
      %s473 = sphi 0, %s459
    $region4: #{kobert_forward.1} parent=1 // loop_header_branch
      %34 = sbr.rel (%p32) target = $region8
    $region5: #{kobert_forward.1} parent=1 // loop_body
      %s36 = ssub.s32 %s31, 1
      %s37 = ssub.s32 %s31, 2
      %s38 = sadd.s32 %s31, 1
      %s40 = sadd.s32 %s39, 1
      %p43 = scmp.eq.s32.totalorder %s31, 1
      %p44 = scmp.ne.s32.totalorder %s39, %s41
      %p45 = scmp.eq.s32.totalorder %s31, 0
      %p46 = por %p44, %p45
      %p47 = scmp.ne.s32.totalorder %s39, %s41
      %p48 = scmp.eq.s32.totalorder %s36, 1
      %p49 = por %p47, %p48
      %p50 = scmp.ne.s32.totalorder %s41, %s42
      %p51 = scmp.eq.s32.totalorder %s36, 0
      %p52 = por %p50, %p51
      %p53 = scmp.ne.s32.totalorder %s41, %s42
      %p54 = scmp.eq.s32.totalorder %s37, 1
      %p55 = por %p53, %p54
      %p57 = scmp.ne.s32.totalorder %s42, %s56
      %p58 = scmp.eq.s32.totalorder %s37, 0
      %p59 = por %p57, %p58
      %s61 = sadd.s32 %s60, 1
      %p64 = scmp.eq.s32.totalorder %s31, 1
      %p65 = scmp.ne.s32.totalorder %s60, %s62
      %p66 = scmp.eq.s32.totalorder %s31, 0
      %p67 = por %p65, %p66
      %p68 = scmp.ne.s32.totalorder %s60, %s62
      %p69 = scmp.eq.s32.totalorder %s36, 1
      %p70 = por %p68, %p69
      %p71 = scmp.ne.s32.totalorder %s62, %s63
      %p72 = scmp.eq.s32.totalorder %s36, 0
      %p73 = por %p71, %p72
      %p74 = scmp.ne.s32.totalorder %s62, %s63
      %p75 = scmp.eq.s32.totalorder %s37, 1
      %p76 = por %p74, %p75
      %p78 = scmp.ne.s32.totalorder %s63, %s77
      %p79 = scmp.eq.s32.totalorder %s37, 0
      %p80 = por %p78, %p79
      %s82 = sadd.s32 %s81, 1
      %p85 = scmp.eq.s32.totalorder %s31, 1
      %p86 = scmp.ne.s32.totalorder %s81, %s83
      %p87 = scmp.eq.s32.totalorder %s31, 0
      %p88 = por %p86, %p87
      %p89 = scmp.ne.s32.totalorder %s81, %s83
      %p90 = scmp.eq.s32.totalorder %s36, 1
      %p91 = por %p89, %p90
      %p92 = scmp.ne.s32.totalorder %s83, %s84
      %p93 = scmp.eq.s32.totalorder %s36, 0
      %p94 = por %p92, %p93
      %p95 = scmp.ne.s32.totalorder %s83, %s84
      %p96 = scmp.eq.s32.totalorder %s37, 1
      %p97 = por %p95, %p96
      %p99 = scmp.ne.s32.totalorder %s84, %s98
      %p100 = scmp.eq.s32.totalorder %s37, 0
      %p101 = por %p99, %p100
      %s102 = ssub.s32 %s31, %s38
      %p103 = scmp.eq.s32.totalorder %s102, 0
      %s105 = sadd.s32 %s104, 1
      %s106 = scalar_select %p103, %s104, %s105
      %p109 = pneg %p103
      %p110 = scmp.eq.s32.totalorder %s31, 1
      %p111 = por %p109, %p110
      %p112 = scmp.ne.s32.totalorder %s104, %s107
      %p113 = scmp.eq.s32.totalorder %s31, 0
      %p114 = por %p112, %p113
      %p115 = scmp.ne.s32.totalorder %s104, %s107
      %p116 = scmp.eq.s32.totalorder %s36, 1
      %p117 = por %p115, %p116
      %p118 = scmp.ne.s32.totalorder %s107, %s108
      %p119 = scmp.eq.s32.totalorder %s36, 0
      %p120 = por %p118, %p119
      %p121 = scmp.ne.s32.totalorder %s107, %s108
      %p122 = scmp.eq.s32.totalorder %s37, 1
      %p123 = por %p121, %p122
      %p125 = scmp.ne.s32.totalorder %s108, %s124
      %p126 = scmp.eq.s32.totalorder %s37, 0
      %p127 = por %p125, %p126
      %s128 = ssub.s32 %s31, %s38
      %p129 = scmp.eq.s32.totalorder %s128, 0
      %s131 = sadd.s32 %s130, 1
      %s132 = scalar_select %p129, %s130, %s131
      %p135 = pneg %p129
      %p136 = scmp.eq.s32.totalorder %s31, 1
      %p137 = por %p135, %p136
      %p138 = scmp.ne.s32.totalorder %s130, %s133
      %p139 = scmp.eq.s32.totalorder %s31, 0
      %p140 = por %p138, %p139
      %p141 = scmp.ne.s32.totalorder %s130, %s133
      %p142 = scmp.eq.s32.totalorder %s36, 1
      %p143 = por %p141, %p142
      %p144 = scmp.ne.s32.totalorder %s133, %s134
      %p145 = scmp.eq.s32.totalorder %s36, 0
      %p146 = por %p144, %p145
      %p147 = scmp.ne.s32.totalorder %s133, %s134
      %p148 = scmp.eq.s32.totalorder %s37, 1
      %p149 = por %p147, %p148
      %p151 = scmp.ne.s32.totalorder %s134, %s150
      %p152 = scmp.eq.s32.totalorder %s37, 0
      %p153 = por %p151, %p152
      %s154 = ssub.s32 %s31, %s38
      %p155 = scmp.eq.s32.totalorder %s154, 0
      %s157 = sadd.s32 %s156, 1
      %s158 = scalar_select %p155, %s156, %s157
      %p161 = pneg %p155
      %p162 = scmp.eq.s32.totalorder %s31, 1
      %p163 = por %p161, %p162
      %p164 = scmp.ne.s32.totalorder %s156, %s159
      %p165 = scmp.eq.s32.totalorder %s31, 0
      %p166 = por %p164, %p165
      %p167 = scmp.ne.s32.totalorder %s156, %s159
      %p168 = scmp.eq.s32.totalorder %s36, 1
      %p169 = por %p167, %p168
      %p170 = scmp.ne.s32.totalorder %s159, %s160
      %p171 = scmp.eq.s32.totalorder %s36, 0
      %p172 = por %p170, %p171
      %p173 = scmp.ne.s32.totalorder %s159, %s160
      %p174 = scmp.eq.s32.totalorder %s37, 1
      %p175 = por %p173, %p174
      %p177 = scmp.ne.s32.totalorder %s160, %s176
      %p178 = scmp.eq.s32.totalorder %s37, 0
      %p179 = por %p177, %p178
      %s180 = ssub.s32 %s31, %s38
      %p181 = scmp.eq.s32.totalorder %s180, 0
      %s183 = sadd.s32 %s182, 1
      %s184 = scalar_select %p181, %s182, %s183
      %p187 = pneg %p181
      %p188 = scmp.eq.s32.totalorder %s31, 1
      %p189 = por %p187, %p188
      %p190 = scmp.ne.s32.totalorder %s182, %s185
      %p191 = scmp.eq.s32.totalorder %s31, 0
      %p192 = por %p190, %p191
      %p193 = scmp.ne.s32.totalorder %s182, %s185
      %p194 = scmp.eq.s32.totalorder %s36, 1
      %p195 = por %p193, %p194
      %p196 = scmp.ne.s32.totalorder %s185, %s186
      %p197 = scmp.eq.s32.totalorder %s36, 0
      %p198 = por %p196, %p197
      %p199 = scmp.ne.s32.totalorder %s185, %s186
      %p200 = scmp.eq.s32.totalorder %s37, 1
      %p201 = por %p199, %p200
      %p203 = scmp.ne.s32.totalorder %s186, %s202
      %p204 = scmp.eq.s32.totalorder %s37, 0
      %p205 = por %p203, %p204
      %s206 = ssub.s32 %s31, %s38
      %p207 = scmp.eq.s32.totalorder %s206, 0
      %s209 = sadd.s32 %s208, 1
      %s210 = scalar_select %p207, %s208, %s209
      %p213 = pneg %p207
      %p214 = scmp.eq.s32.totalorder %s31, 1
      %p215 = por %p213, %p214
      %p216 = scmp.ne.s32.totalorder %s208, %s211
      %p217 = scmp.eq.s32.totalorder %s31, 0
      %p218 = por %p216, %p217
      %p219 = scmp.ne.s32.totalorder %s208, %s211
      %p220 = scmp.eq.s32.totalorder %s36, 1
      %p221 = por %p219, %p220
      %p222 = scmp.ne.s32.totalorder %s211, %s212
      %p223 = scmp.eq.s32.totalorder %s36, 0
      %p224 = por %p222, %p223
      %p225 = scmp.ne.s32.totalorder %s211, %s212
      %p226 = scmp.eq.s32.totalorder %s37, 1
      %p227 = por %p225, %p226
      %p229 = scmp.ne.s32.totalorder %s212, %s228
      %p230 = scmp.eq.s32.totalorder %s37, 0
      %p231 = por %p229, %p230
      %s232 = ssub.s32 %s31, %s38
      %p233 = scmp.eq.s32.totalorder %s232, 0
      %s235 = sadd.s32 %s234, 1
      %s236 = scalar_select %p233, %s234, %s235
      %p239 = pneg %p233
      %p240 = scmp.eq.s32.totalorder %s31, 1
      %p241 = por %p239, %p240
      %p242 = scmp.ne.s32.totalorder %s234, %s237
      %p243 = scmp.eq.s32.totalorder %s31, 0
      %p244 = por %p242, %p243
      %p245 = scmp.ne.s32.totalorder %s234, %s237
      %p246 = scmp.eq.s32.totalorder %s36, 1
      %p247 = por %p245, %p246
      %p248 = scmp.ne.s32.totalorder %s237, %s238
      %p249 = scmp.eq.s32.totalorder %s36, 0
      %p250 = por %p248, %p249
      %p251 = scmp.ne.s32.totalorder %s237, %s238
      %p252 = scmp.eq.s32.totalorder %s37, 1
      %p253 = por %p251, %p252
      %p255 = scmp.ne.s32.totalorder %s238, %s254
      %p256 = scmp.eq.s32.totalorder %s37, 0
      %p257 = por %p255, %p256
      %s258 = ssub.s32 %s31, %s38
      %p259 = scmp.eq.s32.totalorder %s258, 0
      %s261 = sadd.s32 %s260, 1
      %s262 = scalar_select %p259, %s260, %s261
      %p265 = pneg %p259
      %p266 = scmp.eq.s32.totalorder %s31, 1
      %p267 = por %p265, %p266
      %p268 = scmp.ne.s32.totalorder %s260, %s263
      %p269 = scmp.eq.s32.totalorder %s31, 0
      %p270 = por %p268, %p269
      %p271 = scmp.ne.s32.totalorder %s260, %s263
      %p272 = scmp.eq.s32.totalorder %s36, 1
      %p273 = por %p271, %p272
      %p274 = scmp.ne.s32.totalorder %s263, %s264
      %p275 = scmp.eq.s32.totalorder %s36, 0
      %p276 = por %p274, %p275
      %p277 = scmp.ne.s32.totalorder %s263, %s264
      %p278 = scmp.eq.s32.totalorder %s37, 1
      %p279 = por %p277, %p278
      %p281 = scmp.ne.s32.totalorder %s264, %s280
      %p282 = scmp.eq.s32.totalorder %s37, 0
      %p283 = por %p281, %p282
      %s284 = ssub.s32 %s31, %s38
      %p285 = scmp.eq.s32.totalorder %s284, 0
      %s287 = sadd.s32 %s286, 1
      %s288 = scalar_select %p285, %s286, %s287
      %p291 = pneg %p285
      %p292 = scmp.eq.s32.totalorder %s31, 1
      %p293 = por %p291, %p292
      %p294 = scmp.ne.s32.totalorder %s286, %s289
      %p295 = scmp.eq.s32.totalorder %s31, 0
      %p296 = por %p294, %p295
      %p297 = scmp.ne.s32.totalorder %s286, %s289
      %p298 = scmp.eq.s32.totalorder %s36, 1
      %p299 = por %p297, %p298
      %p300 = scmp.ne.s32.totalorder %s289, %s290
      %p301 = scmp.eq.s32.totalorder %s36, 0
      %p302 = por %p300, %p301
      %p303 = scmp.ne.s32.totalorder %s289, %s290
      %p304 = scmp.eq.s32.totalorder %s37, 1
      %p305 = por %p303, %p304
      %p307 = scmp.ne.s32.totalorder %s290, %s306
      %p308 = scmp.eq.s32.totalorder %s37, 0
      %p309 = por %p307, %p308
      %s310 = ssub.s32 %s31, %s38
      %p311 = scmp.eq.s32.totalorder %s310, 0
      %s313 = sadd.s32 %s312, 1
      %s314 = scalar_select %p311, %s312, %s313
      %p317 = pneg %p311
      %p318 = scmp.eq.s32.totalorder %s31, 1
      %p319 = por %p317, %p318
      %p320 = scmp.ne.s32.totalorder %s312, %s315
      %p321 = scmp.eq.s32.totalorder %s31, 0
      %p322 = por %p320, %p321
      %p323 = scmp.ne.s32.totalorder %s312, %s315
      %p324 = scmp.eq.s32.totalorder %s36, 1
      %p325 = por %p323, %p324
      %p326 = scmp.ne.s32.totalorder %s315, %s316
      %p327 = scmp.eq.s32.totalorder %s36, 0
      %p328 = por %p326, %p327
      %p329 = scmp.ne.s32.totalorder %s315, %s316
      %p330 = scmp.eq.s32.totalorder %s37, 1
      %p331 = por %p329, %p330
      %p333 = scmp.ne.s32.totalorder %s316, %s332
      %p334 = scmp.eq.s32.totalorder %s37, 0
      %p335 = por %p333, %p334
      %s336 = ssub.s32 %s31, %s38
      %p337 = scmp.eq.s32.totalorder %s336, 0
      %s339 = sadd.s32 %s338, 1
      %s340 = scalar_select %p337, %s338, %s339
      %p343 = pneg %p337
      %p344 = scmp.eq.s32.totalorder %s31, 1
      %p345 = por %p343, %p344
      %p346 = scmp.ne.s32.totalorder %s338, %s341
      %p347 = scmp.eq.s32.totalorder %s31, 0
      %p348 = por %p346, %p347
      %p349 = scmp.ne.s32.totalorder %s338, %s341
      %p350 = scmp.eq.s32.totalorder %s36, 1
      %p351 = por %p349, %p350
      %p352 = scmp.ne.s32.totalorder %s341, %s342
      %p353 = scmp.eq.s32.totalorder %s36, 0
      %p354 = por %p352, %p353
      %p355 = scmp.ne.s32.totalorder %s341, %s342
      %p356 = scmp.eq.s32.totalorder %s37, 1
      %p357 = por %p355, %p356
      %p359 = scmp.ne.s32.totalorder %s342, %s358
      %p360 = scmp.eq.s32.totalorder %s37, 0
      %p361 = por %p359, %p360
      %s362 = ssub.s32 %s31, %s38
      %p363 = scmp.eq.s32.totalorder %s362, 0
      %s365 = sadd.s32 %s364, 1
      %s366 = scalar_select %p363, %s364, %s365
      %p369 = pneg %p363
      %p370 = scmp.eq.s32.totalorder %s31, 1
      %p371 = por %p369, %p370
      %p372 = scmp.ne.s32.totalorder %s364, %s367
      %p373 = scmp.eq.s32.totalorder %s31, 0
      %p374 = por %p372, %p373
      %p375 = scmp.ne.s32.totalorder %s364, %s367
      %p376 = scmp.eq.s32.totalorder %s36, 1
      %p377 = por %p375, %p376
      %p378 = scmp.ne.s32.totalorder %s367, %s368
      %p379 = scmp.eq.s32.totalorder %s36, 0
      %p380 = por %p378, %p379
      %p381 = scmp.ne.s32.totalorder %s367, %s368
      %p382 = scmp.eq.s32.totalorder %s37, 1
      %p383 = por %p381, %p382
      %p385 = scmp.ne.s32.totalorder %s368, %s384
      %p386 = scmp.eq.s32.totalorder %s37, 0
      %p387 = por %p385, %p386
      %s388 = ssub.s32 %s31, %s38
      %p389 = scmp.eq.s32.totalorder %s388, 0
      %s391 = sadd.s32 %s390, 1
      %s392 = scalar_select %p389, %s390, %s391
      %p395 = pneg %p389
      %p396 = scmp.eq.s32.totalorder %s31, 1
      %p397 = por %p395, %p396
      %p398 = scmp.ne.s32.totalorder %s390, %s393
      %p399 = scmp.eq.s32.totalorder %s31, 0
      %p400 = por %p398, %p399
      %p401 = scmp.ne.s32.totalorder %s390, %s393
      %p402 = scmp.eq.s32.totalorder %s36, 1
      %p403 = por %p401, %p402
      %p404 = scmp.ne.s32.totalorder %s393, %s394
      %p405 = scmp.eq.s32.totalorder %s36, 0
      %p406 = por %p404, %p405
      %p407 = scmp.ne.s32.totalorder %s393, %s394
      %p408 = scmp.eq.s32.totalorder %s37, 1
      %p409 = por %p407, %p408
      %p411 = scmp.ne.s32.totalorder %s394, %s410
      %p412 = scmp.eq.s32.totalorder %s37, 0
      %p413 = por %p411, %p412
      %s415 = sadd.s32 %s414, 1
      %p418 = scmp.eq.s32.totalorder %s31, 1
      %p419 = scmp.ne.s32.totalorder %s414, %s416
      %p420 = scmp.eq.s32.totalorder %s31, 0
      %p421 = por %p419, %p420
      %p422 = scmp.ne.s32.totalorder %s414, %s416
      %p423 = scmp.eq.s32.totalorder %s36, 1
      %p424 = por %p422, %p423
      %p425 = scmp.ne.s32.totalorder %s416, %s417
      %p426 = scmp.eq.s32.totalorder %s36, 0
      %p427 = por %p425, %p426
      %p428 = scmp.ne.s32.totalorder %s416, %s417
      %p429 = scmp.eq.s32.totalorder %s37, 1
      %p430 = por %p428, %p429
      %p432 = scmp.ne.s32.totalorder %s417, %s431
      %p433 = scmp.eq.s32.totalorder %s37, 0
      %p434 = por %p432, %p433
      %s436 = sadd.s32 %s435, 1
      %p439 = scmp.eq.s32.totalorder %s31, 1
      %p440 = scmp.ne.s32.totalorder %s435, %s437
      %p441 = scmp.eq.s32.totalorder %s31, 0
      %p442 = por %p440, %p441
      %p443 = scmp.ne.s32.totalorder %s435, %s437
      %p444 = scmp.eq.s32.totalorder %s36, 1
      %p445 = por %p443, %p444
      %p446 = scmp.ne.s32.totalorder %s437, %s438
      %p447 = scmp.eq.s32.totalorder %s36, 0
      %p448 = por %p446, %p447
      %p449 = scmp.ne.s32.totalorder %s437, %s438
      %p450 = scmp.eq.s32.totalorder %s37, 1
      %p451 = por %p449, %p450
      %p453 = scmp.ne.s32.totalorder %s438, %s452
      %p454 = scmp.eq.s32.totalorder %s37, 0
      %p455 = por %p453, %p454
      %s457 = sadd.s32 %s456, 1
      %p460 = scmp.eq.s32.totalorder %s31, 1
      %p461 = scmp.ne.s32.totalorder %s456, %s458
      %p462 = scmp.eq.s32.totalorder %s31, 0
      %p463 = por %p461, %p462
      %p464 = scmp.ne.s32.totalorder %s456, %s458
      %p465 = scmp.eq.s32.totalorder %s36, 1
      %p466 = por %p464, %p465
      %p467 = scmp.ne.s32.totalorder %s458, %s459
      %p468 = scmp.eq.s32.totalorder %s36, 0
      %p469 = por %p467, %p468
      %p470 = scmp.ne.s32.totalorder %s458, %s459
      %p471 = scmp.eq.s32.totalorder %s37, 1
      %p472 = por %p470, %p471
      %p474 = scmp.ne.s32.totalorder %s459, %s473
      %p475 = scmp.eq.s32.totalorder %s37, 0
      %p476 = por %p474, %p475
      %p477 = scmp.le.s32.totalorder 1, %s31
      %p478 = scmp.lt.s32.totalorder %s31, 3
      %p479 = pnand %p477, %p478
      %p480 = pneg %p479
      // Predicated region
      $region9: #{kobert_forward.1} parent=5 // pred_check
        _
      $region10: #{kobert_forward.1} parent=5 // pred_check_branch
        %482 = sbr.rel (%p479) target = $region12
      $region11: #{kobert_forward.1} parent=5 // pred_region
        %s483 = ssub.s32 %s31, 1
        // Predicated region
        $region13: #{kobert_forward.1} parent=11 // pred_check
          %p484 = pneg %p52
        $region14: #{kobert_forward.1} parent=11 // pred_check_branch
          %486 = sbr.rel (%p484) target = $region16
        $region15: #{kobert_forward.1} parent=11 // pred_region
          _
        $region16: #{kobert_forward.1} parent=11 // pred_fallthru
          _
        // Predicated region
        $region17: #{kobert_forward.1} parent=11 // pred_check
          %p487 = pneg %p73
        $region18: #{kobert_forward.1} parent=11 // pred_check_branch
          %489 = sbr.rel (%p487) target = $region20
        $region19: #{kobert_forward.1} parent=11 // pred_region
          _
        $region20: #{kobert_forward.1} parent=11 // pred_fallthru
          _
        // Predicated region
        $region21: #{kobert_forward.1} parent=11 // pred_check
          %p490 = pneg %p94
        $region22: #{kobert_forward.1} parent=11 // pred_check_branch
          %492 = sbr.rel (%p490) target = $region24
        $region23: #{kobert_forward.1} parent=11 // pred_region
          _
        $region24: #{kobert_forward.1} parent=11 // pred_fallthru
          _
        // Predicated region
        $region25: #{kobert_forward.1} parent=11 // pred_check
          %p493 = pneg %p427
        $region26: #{kobert_forward.1} parent=11 // pred_check_branch
          %495 = sbr.rel (%p493) target = $region28
        $region27: #{kobert_forward.1} parent=11 // pred_region
          _
        $region28: #{kobert_forward.1} parent=11 // pred_fallthru
          _
        // Predicated region
        $region29: #{kobert_forward.1} parent=11 // pred_check
          %p496 = pneg %p448
        $region30: #{kobert_forward.1} parent=11 // pred_check_branch
          %498 = sbr.rel (%p496) target = $region32
        $region31: #{kobert_forward.1} parent=11 // pred_region
          _
        $region32: #{kobert_forward.1} parent=11 // pred_fallthru
          _
      $region12: #{kobert_forward.1} parent=5 // pred_fallthru
        _
      %p499 = scmp.lt.s32.totalorder %s31, 2
      // Predicated region
      $region33: #{kobert_forward.1} parent=5 // pred_check
        %p500 = pneg %p499
      $region34: #{kobert_forward.1} parent=5 // pred_check_branch
        %502 = sbr.rel (%p500) target = $region36
      $region35: #{kobert_forward.1} parent=5 // pred_region
        // Predicated region
        $region37: #{kobert_forward.1} parent=35 // pred_check
          %p503 = pneg %p114
        $region38: #{kobert_forward.1} parent=35 // pred_check_branch
          %505 = sbr.rel (%p503) target = $region40
        $region39: #{kobert_forward.1} parent=35 // pred_region
          %p506 = scmp.lt.s32.totalorder %s31, 1
          %s507 = scalar_select %p506, %s31, 1
          %s508 = smul.addr %s507, 4
          %s509 = smul.addr %s508, 8
          %s510 = scalar_lea.vmem %s4, %s509
        $region40: #{kobert_forward.1} parent=35 // pred_fallthru
          _
        // Predicated region
        $region41: #{kobert_forward.1} parent=35 // pred_check
          %p511 = pneg %p140
        $region42: #{kobert_forward.1} parent=35 // pred_check_branch
          %513 = sbr.rel (%p511) target = $region44
        $region43: #{kobert_forward.1} parent=35 // pred_region
          %p514 = scmp.lt.s32.totalorder %s31, 1
          %s515 = scalar_select %p514, %s31, 1
          %s516 = scalar_lea.vmem %s5, %s515
        $region44: #{kobert_forward.1} parent=35 // pred_fallthru
          _
        // Predicated region
        $region45: #{kobert_forward.1} parent=35 // pred_check
          %p517 = pneg %p166
        $region46: #{kobert_forward.1} parent=35 // pred_check_branch
          %519 = sbr.rel (%p517) target = $region48
        $region47: #{kobert_forward.1} parent=35 // pred_region
          %p520 = scmp.lt.s32.totalorder %s31, 1
          %s521 = scalar_select %p520, %s31, 1
          %s522 = smul.addr %s521, 4
          %s523 = smul.addr %s522, 8
          %s524 = scalar_lea.vmem %s6, %s523
        $region48: #{kobert_forward.1} parent=35 // pred_fallthru
          _
        // Predicated region
        $region49: #{kobert_forward.1} parent=35 // pred_check
          %p525 = pneg %p192
        $region50: #{kobert_forward.1} parent=35 // pred_check_branch
          %527 = sbr.rel (%p525) target = $region52
        $region51: #{kobert_forward.1} parent=35 // pred_region
          %p528 = scmp.lt.s32.totalorder %s31, 1
          %s529 = scalar_select %p528, %s31, 1
          %s530 = scalar_lea.vmem %s7, %s529
        $region52: #{kobert_forward.1} parent=35 // pred_fallthru
          _
        // Predicated region
        $region53: #{kobert_forward.1} parent=35 // pred_check
          %p531 = pneg %p218
        $region54: #{kobert_forward.1} parent=35 // pred_check_branch
          %533 = sbr.rel (%p531) target = $region56
        $region55: #{kobert_forward.1} parent=35 // pred_region
          %p534 = scmp.lt.s32.totalorder %s31, 1
          %s535 = scalar_select %p534, %s31, 1
          %s536 = scalar_lea.vmem %s8, %s535
        $region56: #{kobert_forward.1} parent=35 // pred_fallthru
          _
        // Predicated region
        $region57: #{kobert_forward.1} parent=35 // pred_check
          %p537 = pneg %p244
        $region58: #{kobert_forward.1} parent=35 // pred_check_branch
          %539 = sbr.rel (%p537) target = $region60
        $region59: #{kobert_forward.1} parent=35 // pred_region
          %p540 = scmp.lt.s32.totalorder %s31, 1
          %s541 = scalar_select %p540, %s31, 1
          %s542 = scalar_lea.vmem %s9, %s541
        $region60: #{kobert_forward.1} parent=35 // pred_fallthru
          _
        // Predicated region
        $region61: #{kobert_forward.1} parent=35 // pred_check
          %p543 = pneg %p270
        $region62: #{kobert_forward.1} parent=35 // pred_check_branch
          %545 = sbr.rel (%p543) target = $region64
        $region63: #{kobert_forward.1} parent=35 // pred_region
          %p546 = scmp.lt.s32.totalorder %s31, 1
          %s547 = scalar_select %p546, %s31, 1
          %s548 = smul.addr %s547, 4
          %s549 = smul.addr %s548, 8
          %s550 = scalar_lea.vmem %s10, %s549
        $region64: #{kobert_forward.1} parent=35 // pred_fallthru
          _
        // Predicated region
        $region65: #{kobert_forward.1} parent=35 // pred_check
          %p551 = pneg %p296
        $region66: #{kobert_forward.1} parent=35 // pred_check_branch
          %553 = sbr.rel (%p551) target = $region68
        $region67: #{kobert_forward.1} parent=35 // pred_region
          %p554 = scmp.lt.s32.totalorder %s31, 1
          %s555 = scalar_select %p554, %s31, 1
          %s556 = scalar_lea.vmem %s11, %s555
        $region68: #{kobert_forward.1} parent=35 // pred_fallthru
          _
        // Predicated region
        $region69: #{kobert_forward.1} parent=35 // pred_check
          %p557 = pneg %p322
        $region70: #{kobert_forward.1} parent=35 // pred_check_branch
          %559 = sbr.rel (%p557) target = $region72
        $region71: #{kobert_forward.1} parent=35 // pred_region
          %p560 = scmp.lt.s32.totalorder %s31, 1
          %s561 = scalar_select %p560, %s31, 1
          %s562 = smul.addr %s561, 8
          %s563 = smul.addr %s562, 8
          %s564 = scalar_lea.vmem %s12, %s563
        $region72: #{kobert_forward.1} parent=35 // pred_fallthru
          _
        // Predicated region
        $region73: #{kobert_forward.1} parent=35 // pred_check
          %p565 = pneg %p348
        $region74: #{kobert_forward.1} parent=35 // pred_check_branch
          %567 = sbr.rel (%p565) target = $region76
        $region75: #{kobert_forward.1} parent=35 // pred_region
          %p568 = scmp.lt.s32.totalorder %s31, 1
          %s569 = scalar_select %p568, %s31, 1
          %s570 = scalar_lea.vmem %s13, %s569
        $region76: #{kobert_forward.1} parent=35 // pred_fallthru
          _
        // Predicated region
        $region77: #{kobert_forward.1} parent=35 // pred_check
          %p571 = pneg %p374
        $region78: #{kobert_forward.1} parent=35 // pred_check_branch
          %573 = sbr.rel (%p571) target = $region80
        $region79: #{kobert_forward.1} parent=35 // pred_region
          %p574 = scmp.lt.s32.totalorder %s31, 1
          %s575 = scalar_select %p574, %s31, 1
          %s576 = scalar_lea.vmem %s14, %s575
        $region80: #{kobert_forward.1} parent=35 // pred_fallthru
          _
        // Predicated region
        $region81: #{kobert_forward.1} parent=35 // pred_check
          %p577 = pneg %p400
        $region82: #{kobert_forward.1} parent=35 // pred_check_branch
          %579 = sbr.rel (%p577) target = $region84
        $region83: #{kobert_forward.1} parent=35 // pred_region
          %p580 = scmp.lt.s32.totalorder %s31, 1
          %s581 = scalar_select %p580, %s31, 1
          %s582 = scalar_lea.vmem %s15, %s581
        $region84: #{kobert_forward.1} parent=35 // pred_fallthru
          _
      $region36: #{kobert_forward.1} parent=5 // pred_fallthru
        _
      %p583 = scmp.le.s32.totalorder 1, %s31
      %p584 = scmp.lt.s32.totalorder %s31, 3
      %p585 = pnand %p583, %p584
      %p586 = pneg %p585
      // Predicated region
      $region85: #{kobert_forward.1} parent=5 // pred_check
        _
      $region86: #{kobert_forward.1} parent=5 // pred_check_branch
        %588 = sbr.rel (%p585) target = $region88
      $region87: #{kobert_forward.1} parent=5 // pred_region
        %s589 = ssub.s32 %s31, 1
        %p590 = pneg %p52
        %p591 = pneg %p49
        %p592 = pneg %p73
        %p593 = pneg %p70
        %p594 = pneg %p94
        %p595 = pneg %p91
        %p596 = scmp.lt.s32.totalorder %s36, 1
        %s597 = scalar_select %p596, %s36, 1
        %s598 = smul.addr %s597, 4
        %s599 = smul.addr %s598, 8
        %s600 = scalar_lea.vmem %s4, %s599
        %p601 = pneg %p120
        %p602 = pneg %p117
        %p603 = scmp.lt.s32.totalorder %s36, 1
        %s604 = scalar_select %p603, %s36, 1
        %s605 = scalar_lea.vmem %s5, %s604
        %p606 = pneg %p146
        %p607 = pneg %p143
        %p608 = scmp.lt.s32.totalorder %s36, 1
        %s609 = scalar_select %p608, %s36, 1
        %s610 = smul.addr %s609, 4
        %s611 = smul.addr %s610, 8
        %s612 = scalar_lea.vmem %s6, %s611
        %p613 = pneg %p172
        %p614 = pneg %p169
        %p615 = scmp.lt.s32.totalorder %s36, 1
        %s616 = scalar_select %p615, %s36, 1
        %s617 = scalar_lea.vmem %s7, %s616
        %p618 = pneg %p198
        %p619 = pneg %p195
        %p620 = scmp.lt.s32.totalorder %s36, 1
        %s621 = scalar_select %p620, %s36, 1
        %s622 = scalar_lea.vmem %s8, %s621
        %p623 = pneg %p224
        %p624 = pneg %p221
        %p625 = scmp.lt.s32.totalorder %s36, 1
        %s626 = scalar_select %p625, %s36, 1
        %s627 = scalar_lea.vmem %s9, %s626
        %p628 = pneg %p250
        %p629 = pneg %p247
        %p630 = scmp.lt.s32.totalorder %s36, 1
        %s631 = scalar_select %p630, %s36, 1
        %s632 = smul.addr %s631, 4
        %s633 = smul.addr %s632, 8
        %s634 = scalar_lea.vmem %s10, %s633
        %p635 = pneg %p276
        %p636 = pneg %p273
        %p637 = scmp.lt.s32.totalorder %s36, 1
        %s638 = scalar_select %p637, %s36, 1
        %s639 = scalar_lea.vmem %s11, %s638
        %p640 = pneg %p302
        %p641 = pneg %p299
        %p642 = scmp.lt.s32.totalorder %s36, 1
        %s643 = scalar_select %p642, %s36, 1
        %s644 = smul.addr %s643, 8
        %s645 = smul.addr %s644, 8
        %s646 = scalar_lea.vmem %s12, %s645
        %p647 = pneg %p328
        %p648 = pneg %p325
        %p649 = scmp.lt.s32.totalorder %s36, 1
        %s650 = scalar_select %p649, %s36, 1
        %s651 = scalar_lea.vmem %s13, %s650
        %p652 = pneg %p354
        %p653 = pneg %p351
        %p654 = scmp.lt.s32.totalorder %s36, 1
        %s655 = scalar_select %p654, %s36, 1
        %s656 = scalar_lea.vmem %s14, %s655
        %p657 = pneg %p380
        %p658 = pneg %p377
        %p659 = scmp.lt.s32.totalorder %s36, 1
        %s660 = scalar_select %p659, %s36, 1
        %s661 = scalar_lea.vmem %s15, %s660
        %p662 = pneg %p406
        %p663 = pneg %p403
        %p664 = pneg %p427
        %p665 = pneg %p424
        %p666 = pneg %p448
        %p667 = pneg %p445
        %p668 = pneg %p469
        %p669 = pneg %p466
        %p670 = scmp.lt.s32.totalorder %s36, 1
        %s671 = scalar_select %p670, %s36, 1
        %s672 = smul.addr %s671, 4
        %s673 = smul.addr %s672, 8
        %s674 = scalar_lea.vmem %s4, %s673
        %p675 = scmp.lt.s32.totalorder %s36, 1
        %s676 = scalar_select %p675, %s36, 1
        %s677 = scalar_lea.vmem %s5, %s676
        %p678 = scmp.lt.s32.totalorder %s36, 1
        %s679 = scalar_select %p678, %s36, 1
        %s680 = smul.addr %s679, 4
        %s681 = smul.addr %s680, 8
        %s682 = scalar_lea.vmem %s6, %s681
        %p683 = scmp.lt.s32.totalorder %s36, 1
        %s684 = scalar_select %p683, %s36, 1
        %s685 = scalar_lea.vmem %s7, %s684
        %p686 = scmp.lt.s32.totalorder %s36, 1
        %s687 = scalar_select %p686, %s36, 1
        %s688 = scalar_lea.vmem %s8, %s687
        %p689 = scmp.lt.s32.totalorder %s36, 1
        %s690 = scalar_select %p689, %s36, 1
        %s691 = scalar_lea.vmem %s9, %s690
        %p692 = scmp.lt.s32.totalorder %s36, 1
        %s693 = scalar_select %p692, %s36, 1
        %s694 = smul.addr %s693, 4
        %s695 = smul.addr %s694, 8
        %s696 = scalar_lea.vmem %s10, %s695
        %p697 = scmp.lt.s32.totalorder %s36, 1
        %s698 = scalar_select %p697, %s36, 1
        %s699 = scalar_lea.vmem %s11, %s698
        %p700 = scmp.lt.s32.totalorder %s36, 1
        %s701 = scalar_select %p700, %s36, 1
        %s702 = smul.addr %s701, 8
        %s703 = smul.addr %s702, 8
        %s704 = scalar_lea.vmem %s12, %s703
        %p705 = scmp.lt.s32.totalorder %s36, 1
        %s706 = scalar_select %p705, %s36, 1
        %s707 = scalar_lea.vmem %s13, %s706
        %p708 = scmp.lt.s32.totalorder %s36, 1
        %s709 = scalar_select %p708, %s36, 1
        %s710 = scalar_lea.vmem %s14, %s709
        %p711 = scmp.lt.s32.totalorder %s36, 1
        %s712 = scalar_select %p711, %s36, 1
        %s713 = scalar_lea.vmem %s15, %s712
        %p714 = scmp.eq.s32.totalorder %s36, 0
        // Predicated region
        $region89: #{kobert_forward.1} parent=87 // pred_check
          %p715 = pneg %p714
        $region90: #{kobert_forward.1} parent=87 // pred_check_branch
          %717 = sbr.rel (%p715) target = $region92
        $region91: #{kobert_forward.1} parent=87 // pred_region
          %v718 = vld [vmem:[%s1] sm:$0xff]
          %v719 = vld [vmem:[%s1 + $0x8] sm:$0xff]
          %v720 = vld [vmem:[%s2] sm:$0x1]
          %v721 = vld [vmem:[%s3] sm:$0x1]
          %vm722 = vcmask 261120
          %v723 = vsel %vm722, %v718, 0.0
          %724 = vadd.xlane.f32.xlu0 %v723
          %v725 = vpop.xlane.xlu0 %724
          %v726 = vsel %vm722, %v719, 0.0
          %727 = vadd.xlane.f32.xlu0 %v726
          %v728 = vpop.xlane.xlu0 %727
          %v729 = vrcp.pop 32.0
          %v730 = vmul.f32 %v725, %v729
          %v731 = vmul.f32 %v728, %v729
          %v732 = vsub.f32 %v718, %v730
          %v733 = vsub.f32 %v719, %v731
          %v734 = vmul.f32 %v732, %v732
          %v735 = vmul.f32 %v733, %v733
          %v736 = vsel %vm722, %v734, 0.0
          %737 = vadd.xlane.f32.xlu0 %v736
          %v738 = vpop.xlane.xlu0 %737
          %v739 = vsel %vm722, %v735, 0.0
          %740 = vadd.xlane.f32.xlu0 %v739
          %v741 = vpop.xlane.xlu0 %740
          %v742 = vmul.f32 %v738, %v729
          %v743 = vmul.f32 %v741, %v729
          %v744 = vadd.f32 %v742, 1e-12
          %v745 = vadd.f32 %v743, 1e-12
          %v746 = vrsqrt.pop %v744
          %v747 = vrsqrt.pop %v745
          %v748 = vmul.f32 %v732, %v746
          %v749 = vmul.f32 %v733, %v747
          %v751 = vlaneseq
          %v752 = vshrl.u32 %v751, 7
          %v753 = vsub.s32 0, %v752
          %v754 = vrot.slane %v720, %v753
          %v756 = vmul.f32 %v748, %v754
          %v757 = vmul.f32 %v749, %v754
          %v759 = vlaneseq
          %v760 = vshrl.u32 %v759, 7
          %v761 = vsub.s32 0, %v760
          %v762 = vrot.slane %v721, %v761
          %v764 = vadd.f32 %v756, %v762
          %v765 = vadd.f32 %v757, %v762
          %766 = vst.msk [vmem:[#allocation2] sm:$0xff] %vm722, %v764
          %767 = vst.msk [vmem:[#allocation2 + $0x8] sm:$0xff] %vm722, %v765
        $region92: #{kobert_forward.1} parent=87 // pred_fallthru
          _
        %v768 = vld [vmem:[#allocation2] sm:$0xff]
        %v769 = vld [vmem:[#allocation2 + $0x8] sm:$0xff]
        %v770 = vlaneseq
        %v771 = vand.u32 %v770, 127
        %s772 = sld [smem:[#allocation4]]
        %v773 = vstv %s772
        %vm774 = vcmp.lt.s32.totalorder %v771, %v773
        %v775 = vsel %vm774, 0.0, -1e+09
        %s776 = sld [smem:[#allocation4 + $0x1]]
        %v777 = vstv %s776
        %vm778 = vcmp.lt.s32.totalorder %v771, %v777
        %v779 = vsel %vm778, 0.0, -1e+09
        %v780 = vld [vmem:[%s674] sm:$0xff]
        %v781 = vld [vmem:[%s674 + $0x8] sm:$0xff]
        %v782 = vld [vmem:[%s674 + $0x10] sm:$0xff]
        %v783 = vld [vmem:[%s674 + $0x18] sm:$0xff]
        %v784 = vld [vmem:[%s677] sm:$0x1]
        %v786 = vlaneseq
        %v787 = vshrl.u32 %v786, 7
        %v788 = vsub.s32 0, %v787
        %v789 = vrot.slane %v784, %v788
        %vm791 = vcmask 261120
        %v793 = vsel %vm791, %v768, 0
        %v796 = vsel %vm791, %v769, 0
        %798 = vmatprep.subr.mxu0 0.0
        %799 = vmatpush1.msra.mxu0 0.0
        %800 = vmatprep.subr.mxu0 0.0
        %801 = vmatpush1.msra.mxu0 0.0
        %802 = vmatprep.subr.mxu0 0.0
        %803 = vmatpush1.msra.mxu0 0.0
        %804 = vmatprep.subr.mxu0 0.0
        %805 = vmatpush1.msra.mxu0 0.0
        %806 = vmatprep.subr.mxu0 0.0
        %807 = vmatpush1.msra.mxu0 0.0
        %808 = vmatprep.subr.mxu0 0.0
        %809 = vmatpush1.msra.mxu0 0.0
        %810 = vmatprep.subr.mxu0 0.0
        %811 = vmatpush1.msra.mxu0 0.0
        %812 = vmatprep.subr.mxu0 0.0
        %813 = vmatpush1.msra.mxu0 0.0
        %814 = vmatprep.subr.mxu0 0.0
        %815 = vmatpush1.msra.mxu0 0.0
        %816 = vmatprep.subr.mxu0 0.0
        %817 = vmatpush1.msra.mxu0 0.0
        %818 = vmatprep.subr.mxu0 0.0
        %819 = vmatpush1.msra.mxu0 0.0
        %820 = vmatprep.subr.mxu0 0.0
        %821 = vmatpush1.msra.mxu0 0.0
        %822 = vmatprep.subr.mxu0 0.0
        %823 = vmatpush1.msra.mxu0 %v783
        %824 = vmatprep.subr.mxu0 0.0
        %825 = vmatpush1.msra.mxu0 %v782
        %826 = vmatprep.subr.mxu0 0.0
        %827 = vmatpush1.msra.mxu0 %v781
        %828 = vmatprep.subr.mxu0 0.0
        %829 = vmatpush1.msra.mxu0 %v780
        %830 = vmatprep.subr.mxu0 0.0
        %831 = vmatpush2.msra.mxu0 0.0
        %832 = vmatprep.subr.mxu0 0.0
        %833 = vmatpush2.msra.mxu0 0.0
        %834 = vmatprep.subr.mxu0 0.0
        %835 = vmatpush2.msra.mxu0 0.0
        %836 = vmatprep.subr.mxu0 0.0
        %837 = vmatpush2.msra.mxu0 0.0
        %838 = vmatprep.subr.mxu0 0.0
        %839 = vmatpush2.msra.mxu0 0.0
        %840 = vmatprep.subr.mxu0 0.0
        %841 = vmatpush2.msra.mxu0 0.0
        %842 = vmatprep.subr.mxu0 0.0
        %843 = vmatpush2.msra.mxu0 0.0
        %844 = vmatprep.subr.mxu0 0.0
        %845 = vmatpush2.msra.mxu0 0.0
        %846 = vmatprep.subr.mxu0 0.0
        %847 = vmatpush2.msra.mxu0 0.0
        %848 = vmatprep.subr.mxu0 0.0
        %849 = vmatpush2.msra.mxu0 0.0
        %850 = vmatprep.subr.mxu0 0.0
        %851 = vmatpush2.msra.mxu0 0.0
        %852 = vmatprep.subr.mxu0 0.0
        %853 = vmatpush2.msra.mxu0 0.0
        %854 = vmatprep.subr.mxu0 0.0
        %855 = vmatpush2.msra.mxu0 0.0
        %856 = vmatprep.subr.mxu0 0.0
        %857 = vmatpush2.msra.mxu0 0.0
        %858 = vmatprep.subr.mxu0 0.0
        %859 = vmatpush2.msra.mxu0 0.0
        %860 = vmatprep.subr.mxu0 0.0
        %861 = vmatpush2.msra.mxu0 0.0
        %862 = vmatprep.mubr.f32.mxu0 0.0
        %863 = vmatmul.mubr.f32.gmra.mxu0 %v793
        %v864 = vpop.f32.mrf.mxu0
        %v865 = vadd.f32 %v789, %v864
        %v866 = vpop.f32.mrf.mxu0
        %867 = vmatprep.mubr.f32.mxu0 0.0
        %868 = vmatmul.mubr.f32.gmra.mxu0 %v796
        %v869 = vpop.f32.mrf.mxu0
        %v870 = vadd.f32 %v789, %v869
        %v871 = vpop.f32.mrf.mxu0
        %872 = vdwg.mxu0
        %874 = vrot.lane.b32.xlu0 %v865, 96
        %v875 = vpop.permute.xlu0 %874
        %vm876 = vcmask 130048
        %v877 = vsel %vm876, %v865, 0
        %v879 = vsel %vm876, %v875, 0
        %881 = vmatprep.subr.mxu0 0.0
        %882 = vmatpush1.xpose.msra.mxu0 0.0
        %883 = vmatprep.subr.mxu0 0.0
        %884 = vmatpush1.xpose.msra.mxu0 0.0
        %885 = vmatprep.subr.mxu0 0.0
        %886 = vmatpush1.xpose.msra.mxu0 0.0
        %887 = vmatprep.subr.mxu0 0.0
        %888 = vmatpush1.xpose.msra.mxu0 0.0
        %889 = vmatprep.subr.mxu0 0.0
        %890 = vmatpush1.xpose.msra.mxu0 0.0
        %891 = vmatprep.subr.mxu0 0.0
        %892 = vmatpush1.xpose.msra.mxu0 0.0
        %893 = vmatprep.subr.mxu0 0.0
        %894 = vmatpush1.xpose.msra.mxu0 0.0
        %895 = vmatprep.subr.mxu0 0.0
        %896 = vmatpush1.xpose.msra.mxu0 0.0
        %897 = vmatprep.subr.mxu0 0.0
        %898 = vmatpush1.xpose.msra.mxu0 0.0
        %899 = vmatprep.subr.mxu0 0.0
        %900 = vmatpush1.xpose.msra.mxu0 0.0
        %901 = vmatprep.subr.mxu0 0.0
        %902 = vmatpush1.xpose.msra.mxu0 0.0
        %903 = vmatprep.subr.mxu0 0.0
        %904 = vmatpush1.xpose.msra.mxu0 0.0
        %905 = vmatprep.subr.mxu0 0.0
        %906 = vmatpush1.xpose.msra.mxu0 0.0
        %907 = vmatprep.subr.mxu0 0.0
        %908 = vmatpush1.xpose.msra.mxu0 0.0
        %909 = vmatprep.subr.mxu0 0.0
        %910 = vmatpush1.xpose.msra.mxu0 0.0
        %911 = vmatprep.subr.mxu0 0.0
        %912 = vmatpush1.xpose.msra.mxu0 %v879
        %913 = vmatprep.subr.mxu0 0.0
        %914 = vmatpush2.xpose.msra.mxu0 0.0
        %915 = vmatprep.subr.mxu0 0.0
        %916 = vmatpush2.xpose.msra.mxu0 0.0
        %917 = vmatprep.subr.mxu0 0.0
        %918 = vmatpush2.xpose.msra.mxu0 0.0
        %919 = vmatprep.subr.mxu0 0.0
        %920 = vmatpush2.xpose.msra.mxu0 0.0
        %921 = vmatprep.subr.mxu0 0.0
        %922 = vmatpush2.xpose.msra.mxu0 0.0
        %923 = vmatprep.subr.mxu0 0.0
        %924 = vmatpush2.xpose.msra.mxu0 0.0
        %925 = vmatprep.subr.mxu0 0.0
        %926 = vmatpush2.xpose.msra.mxu0 0.0
        %927 = vmatprep.subr.mxu0 0.0
        %928 = vmatpush2.xpose.msra.mxu0 0.0
        %929 = vmatprep.subr.mxu0 0.0
        %930 = vmatpush2.xpose.msra.mxu0 0.0
        %931 = vmatprep.subr.mxu0 0.0
        %932 = vmatpush2.xpose.msra.mxu0 0.0
        %933 = vmatprep.subr.mxu0 0.0
        %934 = vmatpush2.xpose.msra.mxu0 0.0
        %935 = vmatprep.subr.mxu0 0.0
        %936 = vmatpush2.xpose.msra.mxu0 0.0
        %937 = vmatprep.subr.mxu0 0.0
        %938 = vmatpush2.xpose.msra.mxu0 0.0
        %939 = vmatprep.subr.mxu0 0.0
        %940 = vmatpush2.xpose.msra.mxu0 0.0
        %941 = vmatprep.subr.mxu0 0.0
        %942 = vmatpush2.xpose.msra.mxu0 0.0
        %943 = vmatprep.subr.mxu0 0.0
        %944 = vmatpush2.xpose.msra.mxu0 0.0
        %945 = vmatprep.mubr.f32.mxu0 0.0
        %946 = vmatmul.mubr.f32.gmra.mxu0 %v877
        %v947 = vpop.f32.mrf.mxu0
        %v948 = vadd.f32 0.0, %v947
        %v949 = vpop.f32.mrf.mxu0
        %950 = vdwg.mxu0
        %952 = vrot.lane.b32.xlu0 %v870, 96
        %v953 = vpop.permute.xlu0 %952
        %v954 = vsel %vm876, %v870, 0
        %v956 = vsel %vm876, %v953, 0
        %958 = vmatprep.subr.mxu0 0.0
        %959 = vmatpush1.xpose.msra.mxu0 0.0
        %960 = vmatprep.subr.mxu0 0.0
        %961 = vmatpush1.xpose.msra.mxu0 0.0
        %962 = vmatprep.subr.mxu0 0.0
        %963 = vmatpush1.xpose.msra.mxu0 0.0
        %964 = vmatprep.subr.mxu0 0.0
        %965 = vmatpush1.xpose.msra.mxu0 0.0
        %966 = vmatprep.subr.mxu0 0.0
        %967 = vmatpush1.xpose.msra.mxu0 0.0
        %968 = vmatprep.subr.mxu0 0.0
        %969 = vmatpush1.xpose.msra.mxu0 0.0
        %970 = vmatprep.subr.mxu0 0.0
        %971 = vmatpush1.xpose.msra.mxu0 0.0
        %972 = vmatprep.subr.mxu0 0.0
        %973 = vmatpush1.xpose.msra.mxu0 0.0
        %974 = vmatprep.subr.mxu0 0.0
        %975 = vmatpush1.xpose.msra.mxu0 0.0
        %976 = vmatprep.subr.mxu0 0.0
        %977 = vmatpush1.xpose.msra.mxu0 0.0
        %978 = vmatprep.subr.mxu0 0.0
        %979 = vmatpush1.xpose.msra.mxu0 0.0
        %980 = vmatprep.subr.mxu0 0.0
        %981 = vmatpush1.xpose.msra.mxu0 0.0
        %982 = vmatprep.subr.mxu0 0.0
        %983 = vmatpush1.xpose.msra.mxu0 0.0
        %984 = vmatprep.subr.mxu0 0.0
        %985 = vmatpush1.xpose.msra.mxu0 0.0
        %986 = vmatprep.subr.mxu0 0.0
        %987 = vmatpush1.xpose.msra.mxu0 0.0
        %988 = vmatprep.subr.mxu0 0.0
        %989 = vmatpush1.xpose.msra.mxu0 %v956
        %990 = vmatprep.subr.mxu0 0.0
        %991 = vmatpush2.xpose.msra.mxu0 0.0
        %992 = vmatprep.subr.mxu0 0.0
        %993 = vmatpush2.xpose.msra.mxu0 0.0
        %994 = vmatprep.subr.mxu0 0.0
        %995 = vmatpush2.xpose.msra.mxu0 0.0
        %996 = vmatprep.subr.mxu0 0.0
        %997 = vmatpush2.xpose.msra.mxu0 0.0
        %998 = vmatprep.subr.mxu0 0.0
        %999 = vmatpush2.xpose.msra.mxu0 0.0
        %1000 = vmatprep.subr.mxu0 0.0
        %1001 = vmatpush2.xpose.msra.mxu0 0.0
        %1002 = vmatprep.subr.mxu0 0.0
        %1003 = vmatpush2.xpose.msra.mxu0 0.0
        %1004 = vmatprep.subr.mxu0 0.0
        %1005 = vmatpush2.xpose.msra.mxu0 0.0
        %1006 = vmatprep.subr.mxu0 0.0
        %1007 = vmatpush2.xpose.msra.mxu0 0.0
        %1008 = vmatprep.subr.mxu0 0.0
        %1009 = vmatpush2.xpose.msra.mxu0 0.0
        %1010 = vmatprep.subr.mxu0 0.0
        %1011 = vmatpush2.xpose.msra.mxu0 0.0
        %1012 = vmatprep.subr.mxu0 0.0
        %1013 = vmatpush2.xpose.msra.mxu0 0.0
        %1014 = vmatprep.subr.mxu0 0.0
        %1015 = vmatpush2.xpose.msra.mxu0 0.0
        %1016 = vmatprep.subr.mxu0 0.0
        %1017 = vmatpush2.xpose.msra.mxu0 0.0
        %1018 = vmatprep.subr.mxu0 0.0
        %1019 = vmatpush2.xpose.msra.mxu0 0.0
        %1020 = vmatprep.subr.mxu0 0.0
        %1021 = vmatpush2.xpose.msra.mxu0 0.0
        %1022 = vmatprep.mubr.f32.mxu0 0.0
        %1023 = vmatmul.mubr.f32.gmra.mxu0 %v954
        %v1024 = vpop.f32.mrf.mxu0
        %v1025 = vadd.f32 0.0, %v1024
        %v1026 = vpop.f32.mrf.mxu0
        %1027 = vdwg.mxu0
        %v1028 = vmul.f32 %v948, 0.25
        %v1029 = vmul.f32 %v1025, 0.25
        %v1030 = vlaneseq
        %v1031 = vshrl.u32 %v1030, 7
        %v1032 = vsub.s32 0, %v1031
        %v1033 = vrot.slane %v775, %v1032
        %v1034 = vlaneseq
        %v1035 = vshrl.u32 %v1034, 7
        %v1036 = vsub.s32 0, %v1035
        %v1037 = vrot.slane %v779, %v1036
        %v1038 = vadd.f32 %v1028, %v1033
        %v1039 = vadd.f32 %v1029, %v1037
        %vm1040 = vcmask 64512
        %v1041 = vsel %vm1040, %v1038, -inf
        %1042 = vmax.xlane.f32.xlu0 %v1041
        %v1043 = vpop.xlane.xlu0 %1042
        %v1044 = vsel %vm1040, %v1039, -inf
        %1045 = vmax.xlane.f32.xlu0 %v1044
        %v1046 = vpop.xlane.xlu0 %1045
        %v1047 = vsub.f32 %v1038, %v1043
        %v1048 = vsub.f32 %v1039, %v1046
        %v1049 = vmul.f32 %v1047, 1.442695
        %v1050 = vpow.pop %v1049
        %v1051 = vmul.f32 %v1048, 1.442695
        %v1052 = vpow.pop %v1051
        %v1053 = vsel %vm1040, %v1050, 0.0
        %1054 = vadd.xlane.f32.xlu0 %v1053
        %v1055 = vpop.xlane.xlu0 %1054
        %v1056 = vsel %vm1040, %v1052, 0.0
        %1057 = vadd.xlane.f32.xlu0 %v1056
        %v1058 = vpop.xlane.xlu0 %1057
        %v1059 = vrcp.pop %v1055
        %v1060 = vrcp.pop %v1058
        %v1061 = vmul.f32 %v1050, %v1059
        %v1062 = vmul.f32 %v1052, %v1060
        %1063 = vrot.lane.b32.xlu0 %v865, 64
        %v1064 = vpop.permute.xlu0 %1063
        %v1067 = vsel %vm1040, %v1061, 0
        %1069 = vmatprep.subr.mxu0 0.0
        %1070 = vmatpush1.msra.mxu0 0.0
        %1071 = vmatprep.subr.mxu0 0.0
        %1072 = vmatpush1.msra.mxu0 0.0
        %1073 = vmatprep.subr.mxu0 0.0
        %1074 = vmatpush1.msra.mxu0 0.0
        %1075 = vmatprep.subr.mxu0 0.0
        %1076 = vmatpush1.msra.mxu0 0.0
        %1077 = vmatprep.subr.mxu0 0.0
        %1078 = vmatpush1.msra.mxu0 0.0
        %1079 = vmatprep.subr.mxu0 0.0
        %1080 = vmatpush1.msra.mxu0 0.0
        %1081 = vmatprep.subr.mxu0 0.0
        %1082 = vmatpush1.msra.mxu0 0.0
        %1083 = vmatprep.subr.mxu0 0.0
        %1084 = vmatpush1.msra.mxu0 0.0
        %1085 = vmatprep.subr.mxu0 0.0
        %1086 = vmatpush1.msra.mxu0 0.0
        %1087 = vmatprep.subr.mxu0 0.0
        %1088 = vmatpush1.msra.mxu0 0.0
        %1089 = vmatprep.subr.mxu0 0.0
        %1090 = vmatpush1.msra.mxu0 0.0
        %1091 = vmatprep.subr.mxu0 0.0
        %1092 = vmatpush1.msra.mxu0 0.0
        %1093 = vmatprep.subr.mxu0 0.0
        %1094 = vmatpush1.msra.mxu0 0.0
        %1095 = vmatprep.subr.mxu0 0.0
        %1096 = vmatpush1.msra.mxu0 0.0
        %1097 = vmatprep.subr.mxu0 0.0
        %1098 = vmatpush1.msra.mxu0 0.0
        %1099 = vmatprep.subr.mxu0 0.0
        %1100 = vmatpush1.msra.mxu0 %v1064
        %1101 = vmatprep.subr.mxu0 0.0
        %1102 = vmatpush2.msra.mxu0 0.0
        %1103 = vmatprep.subr.mxu0 0.0
        %1104 = vmatpush2.msra.mxu0 0.0
        %1105 = vmatprep.subr.mxu0 0.0
        %1106 = vmatpush2.msra.mxu0 0.0
        %1107 = vmatprep.subr.mxu0 0.0
        %1108 = vmatpush2.msra.mxu0 0.0
        %1109 = vmatprep.subr.mxu0 0.0
        %1110 = vmatpush2.msra.mxu0 0.0
        %1111 = vmatprep.subr.mxu0 0.0
        %1112 = vmatpush2.msra.mxu0 0.0
        %1113 = vmatprep.subr.mxu0 0.0
        %1114 = vmatpush2.msra.mxu0 0.0
        %1115 = vmatprep.subr.mxu0 0.0
        %1116 = vmatpush2.msra.mxu0 0.0
        %1117 = vmatprep.subr.mxu0 0.0
        %1118 = vmatpush2.msra.mxu0 0.0
        %1119 = vmatprep.subr.mxu0 0.0
        %1120 = vmatpush2.msra.mxu0 0.0
        %1121 = vmatprep.subr.mxu0 0.0
        %1122 = vmatpush2.msra.mxu0 0.0
        %1123 = vmatprep.subr.mxu0 0.0
        %1124 = vmatpush2.msra.mxu0 0.0
        %1125 = vmatprep.subr.mxu0 0.0
        %1126 = vmatpush2.msra.mxu0 0.0
        %1127 = vmatprep.subr.mxu0 0.0
        %1128 = vmatpush2.msra.mxu0 0.0
        %1129 = vmatprep.subr.mxu0 0.0
        %1130 = vmatpush2.msra.mxu0 0.0
        %1131 = vmatprep.subr.mxu0 0.0
        %1132 = vmatpush2.msra.mxu0 0.0
        %1133 = vmatprep.mubr.f32.mxu0 0.0
        %1134 = vmatmul.mubr.f32.gmra.mxu0 %v1067
        %v1135 = vpop.f32.mrf.mxu0
        %v1136 = vadd.f32 0.0, %v1135
        %v1137 = vpop.f32.mrf.mxu0
        %1138 = vdwg.mxu0
        %1139 = vrot.lane.b32.xlu0 %v870, 64
        %v1140 = vpop.permute.xlu0 %1139
        %v1143 = vsel %vm1040, %v1062, 0
        %1145 = vmatprep.subr.mxu0 0.0
        %1146 = vmatpush1.msra.mxu0 0.0
        %1147 = vmatprep.subr.mxu0 0.0
        %1148 = vmatpush1.msra.mxu0 0.0
        %1149 = vmatprep.subr.mxu0 0.0
        %1150 = vmatpush1.msra.mxu0 0.0
        %1151 = vmatprep.subr.mxu0 0.0
        %1152 = vmatpush1.msra.mxu0 0.0
        %1153 = vmatprep.subr.mxu0 0.0
        %1154 = vmatpush1.msra.mxu0 0.0
        %1155 = vmatprep.subr.mxu0 0.0
        %1156 = vmatpush1.msra.mxu0 0.0
        %1157 = vmatprep.subr.mxu0 0.0
        %1158 = vmatpush1.msra.mxu0 0.0
        %1159 = vmatprep.subr.mxu0 0.0
        %1160 = vmatpush1.msra.mxu0 0.0
        %1161 = vmatprep.subr.mxu0 0.0
        %1162 = vmatpush1.msra.mxu0 0.0
        %1163 = vmatprep.subr.mxu0 0.0
        %1164 = vmatpush1.msra.mxu0 0.0
        %1165 = vmatprep.subr.mxu0 0.0
        %1166 = vmatpush1.msra.mxu0 0.0
        %1167 = vmatprep.subr.mxu0 0.0
        %1168 = vmatpush1.msra.mxu0 0.0
        %1169 = vmatprep.subr.mxu0 0.0
        %1170 = vmatpush1.msra.mxu0 0.0
        %1171 = vmatprep.subr.mxu0 0.0
        %1172 = vmatpush1.msra.mxu0 0.0
        %1173 = vmatprep.subr.mxu0 0.0
        %1174 = vmatpush1.msra.mxu0 0.0
        %1175 = vmatprep.subr.mxu0 0.0
        %1176 = vmatpush1.msra.mxu0 %v1140
        %1177 = vmatprep.subr.mxu0 0.0
        %1178 = vmatpush2.msra.mxu0 0.0
        %1179 = vmatprep.subr.mxu0 0.0
        %1180 = vmatpush2.msra.mxu0 0.0
        %1181 = vmatprep.subr.mxu0 0.0
        %1182 = vmatpush2.msra.mxu0 0.0
        %1183 = vmatprep.subr.mxu0 0.0
        %1184 = vmatpush2.msra.mxu0 0.0
        %1185 = vmatprep.subr.mxu0 0.0
        %1186 = vmatpush2.msra.mxu0 0.0
        %1187 = vmatprep.subr.mxu0 0.0
        %1188 = vmatpush2.msra.mxu0 0.0
        %1189 = vmatprep.subr.mxu0 0.0
        %1190 = vmatpush2.msra.mxu0 0.0
        %1191 = vmatprep.subr.mxu0 0.0
        %1192 = vmatpush2.msra.mxu0 0.0
        %1193 = vmatprep.subr.mxu0 0.0
        %1194 = vmatpush2.msra.mxu0 0.0
        %1195 = vmatprep.subr.mxu0 0.0
        %1196 = vmatpush2.msra.mxu0 0.0
        %1197 = vmatprep.subr.mxu0 0.0
        %1198 = vmatpush2.msra.mxu0 0.0
        %1199 = vmatprep.subr.mxu0 0.0
        %1200 = vmatpush2.msra.mxu0 0.0
        %1201 = vmatprep.subr.mxu0 0.0
        %1202 = vmatpush2.msra.mxu0 0.0
        %1203 = vmatprep.subr.mxu0 0.0
        %1204 = vmatpush2.msra.mxu0 0.0
        %1205 = vmatprep.subr.mxu0 0.0
        %1206 = vmatpush2.msra.mxu0 0.0
        %1207 = vmatprep.subr.mxu0 0.0
        %1208 = vmatpush2.msra.mxu0 0.0
        %1209 = vmatprep.mubr.f32.mxu0 0.0
        %1210 = vmatmul.mubr.f32.gmra.mxu0 %v1143
        %v1211 = vpop.f32.mrf.mxu0
        %v1212 = vadd.f32 0.0, %v1211
        %v1213 = vpop.f32.mrf.mxu0
        %1214 = vdwg.mxu0
        %1215 = vrot.lane.b32.xlu0 %v865, 112
        %v1216 = vpop.permute.xlu0 %1215
        %1217 = vrot.lane.b32.xlu0 %v865, 80
        %v1218 = vpop.permute.xlu0 %1217
        %v1219 = vsel %vm876, %v1216, 0
        %v1221 = vsel %vm876, %v1218, 0
        %1223 = vmatprep.subr.mxu0 0.0
        %1224 = vmatpush1.xpose.msra.mxu0 0.0
        %1225 = vmatprep.subr.mxu0 0.0
        %1226 = vmatpush1.xpose.msra.mxu0 0.0
        %1227 = vmatprep.subr.mxu0 0.0
        %1228 = vmatpush1.xpose.msra.mxu0 0.0
        %1229 = vmatprep.subr.mxu0 0.0
        %1230 = vmatpush1.xpose.msra.mxu0 0.0
        %1231 = vmatprep.subr.mxu0 0.0
        %1232 = vmatpush1.xpose.msra.mxu0 0.0
        %1233 = vmatprep.subr.mxu0 0.0
        %1234 = vmatpush1.xpose.msra.mxu0 0.0
        %1235 = vmatprep.subr.mxu0 0.0
        %1236 = vmatpush1.xpose.msra.mxu0 0.0
        %1237 = vmatprep.subr.mxu0 0.0
        %1238 = vmatpush1.xpose.msra.mxu0 0.0
        %1239 = vmatprep.subr.mxu0 0.0
        %1240 = vmatpush1.xpose.msra.mxu0 0.0
        %1241 = vmatprep.subr.mxu0 0.0
        %1242 = vmatpush1.xpose.msra.mxu0 0.0
        %1243 = vmatprep.subr.mxu0 0.0
        %1244 = vmatpush1.xpose.msra.mxu0 0.0
        %1245 = vmatprep.subr.mxu0 0.0
        %1246 = vmatpush1.xpose.msra.mxu0 0.0
        %1247 = vmatprep.subr.mxu0 0.0
        %1248 = vmatpush1.xpose.msra.mxu0 0.0
        %1249 = vmatprep.subr.mxu0 0.0
        %1250 = vmatpush1.xpose.msra.mxu0 0.0
        %1251 = vmatprep.subr.mxu0 0.0
        %1252 = vmatpush1.xpose.msra.mxu0 0.0
        %1253 = vmatprep.subr.mxu0 0.0
        %1254 = vmatpush1.xpose.msra.mxu0 %v1221
        %1255 = vmatprep.subr.mxu0 0.0
        %1256 = vmatpush2.xpose.msra.mxu0 0.0
        %1257 = vmatprep.subr.mxu0 0.0
        %1258 = vmatpush2.xpose.msra.mxu0 0.0
        %1259 = vmatprep.subr.mxu0 0.0
        %1260 = vmatpush2.xpose.msra.mxu0 0.0
        %1261 = vmatprep.subr.mxu0 0.0
        %1262 = vmatpush2.xpose.msra.mxu0 0.0
        %1263 = vmatprep.subr.mxu0 0.0
        %1264 = vmatpush2.xpose.msra.mxu0 0.0
        %1265 = vmatprep.subr.mxu0 0.0
        %1266 = vmatpush2.xpose.msra.mxu0 0.0
        %1267 = vmatprep.subr.mxu0 0.0
        %1268 = vmatpush2.xpose.msra.mxu0 0.0
        %1269 = vmatprep.subr.mxu0 0.0
        %1270 = vmatpush2.xpose.msra.mxu0 0.0
        %1271 = vmatprep.subr.mxu0 0.0
        %1272 = vmatpush2.xpose.msra.mxu0 0.0
        %1273 = vmatprep.subr.mxu0 0.0
        %1274 = vmatpush2.xpose.msra.mxu0 0.0
        %1275 = vmatprep.subr.mxu0 0.0
        %1276 = vmatpush2.xpose.msra.mxu0 0.0
        %1277 = vmatprep.subr.mxu0 0.0
        %1278 = vmatpush2.xpose.msra.mxu0 0.0
        %1279 = vmatprep.subr.mxu0 0.0
        %1280 = vmatpush2.xpose.msra.mxu0 0.0
        %1281 = vmatprep.subr.mxu0 0.0
        %1282 = vmatpush2.xpose.msra.mxu0 0.0
        %1283 = vmatprep.subr.mxu0 0.0
        %1284 = vmatpush2.xpose.msra.mxu0 0.0
        %1285 = vmatprep.subr.mxu0 0.0
        %1286 = vmatpush2.xpose.msra.mxu0 0.0
        %1287 = vmatprep.mubr.f32.mxu0 0.0
        %1288 = vmatmul.mubr.f32.gmra.mxu0 %v1219
        %v1289 = vpop.f32.mrf.mxu0
        %v1290 = vadd.f32 0.0, %v1289
        %v1291 = vpop.f32.mrf.mxu0
        %1292 = vdwg.mxu0
        %1293 = vrot.lane.b32.xlu0 %v870, 112
        %v1294 = vpop.permute.xlu0 %1293
        %1295 = vrot.lane.b32.xlu0 %v870, 80
        %v1296 = vpop.permute.xlu0 %1295
        %v1297 = vsel %vm876, %v1294, 0
        %v1299 = vsel %vm876, %v1296, 0
        %1301 = vmatprep.subr.mxu0 0.0
        %1302 = vmatpush1.xpose.msra.mxu0 0.0
        %1303 = vmatprep.subr.mxu0 0.0
        %1304 = vmatpush1.xpose.msra.mxu0 0.0
        %1305 = vmatprep.subr.mxu0 0.0
        %1306 = vmatpush1.xpose.msra.mxu0 0.0
        %1307 = vmatprep.subr.mxu0 0.0
        %1308 = vmatpush1.xpose.msra.mxu0 0.0
        %1309 = vmatprep.subr.mxu0 0.0
        %1310 = vmatpush1.xpose.msra.mxu0 0.0
        %1311 = vmatprep.subr.mxu0 0.0
        %1312 = vmatpush1.xpose.msra.mxu0 0.0
        %1313 = vmatprep.subr.mxu0 0.0
        %1314 = vmatpush1.xpose.msra.mxu0 0.0
        %1315 = vmatprep.subr.mxu0 0.0
        %1316 = vmatpush1.xpose.msra.mxu0 0.0
        %1317 = vmatprep.subr.mxu0 0.0
        %1318 = vmatpush1.xpose.msra.mxu0 0.0
        %1319 = vmatprep.subr.mxu0 0.0
        %1320 = vmatpush1.xpose.msra.mxu0 0.0
        %1321 = vmatprep.subr.mxu0 0.0
        %1322 = vmatpush1.xpose.msra.mxu0 0.0
        %1323 = vmatprep.subr.mxu0 0.0
        %1324 = vmatpush1.xpose.msra.mxu0 0.0
        %1325 = vmatprep.subr.mxu0 0.0
        %1326 = vmatpush1.xpose.msra.mxu0 0.0
        %1327 = vmatprep.subr.mxu0 0.0
        %1328 = vmatpush1.xpose.msra.mxu0 0.0
        %1329 = vmatprep.subr.mxu0 0.0
        %1330 = vmatpush1.xpose.msra.mxu0 0.0
        %1331 = vmatprep.subr.mxu0 0.0
        %1332 = vmatpush1.xpose.msra.mxu0 %v1299
        %1333 = vmatprep.subr.mxu0 0.0
        %1334 = vmatpush2.xpose.msra.mxu0 0.0
        %1335 = vmatprep.subr.mxu0 0.0
        %1336 = vmatpush2.xpose.msra.mxu0 0.0
        %1337 = vmatprep.subr.mxu0 0.0
        %1338 = vmatpush2.xpose.msra.mxu0 0.0
        %1339 = vmatprep.subr.mxu0 0.0
        %1340 = vmatpush2.xpose.msra.mxu0 0.0
        %1341 = vmatprep.subr.mxu0 0.0
        %1342 = vmatpush2.xpose.msra.mxu0 0.0
        %1343 = vmatprep.subr.mxu0 0.0
        %1344 = vmatpush2.xpose.msra.mxu0 0.0
        %1345 = vmatprep.subr.mxu0 0.0
        %1346 = vmatpush2.xpose.msra.mxu0 0.0
        %1347 = vmatprep.subr.mxu0 0.0
        %1348 = vmatpush2.xpose.msra.mxu0 0.0
        %1349 = vmatprep.subr.mxu0 0.0
        %1350 = vmatpush2.xpose.msra.mxu0 0.0
        %1351 = vmatprep.subr.mxu0 0.0
        %1352 = vmatpush2.xpose.msra.mxu0 0.0
        %1353 = vmatprep.subr.mxu0 0.0
        %1354 = vmatpush2.xpose.msra.mxu0 0.0
        %1355 = vmatprep.subr.mxu0 0.0
        %1356 = vmatpush2.xpose.msra.mxu0 0.0
        %1357 = vmatprep.subr.mxu0 0.0
        %1358 = vmatpush2.xpose.msra.mxu0 0.0
        %1359 = vmatprep.subr.mxu0 0.0
        %1360 = vmatpush2.xpose.msra.mxu0 0.0
        %1361 = vmatprep.subr.mxu0 0.0
        %1362 = vmatpush2.xpose.msra.mxu0 0.0
        %1363 = vmatprep.subr.mxu0 0.0
        %1364 = vmatpush2.xpose.msra.mxu0 0.0
        %1365 = vmatprep.mubr.f32.mxu0 0.0
        %1366 = vmatmul.mubr.f32.gmra.mxu0 %v1297
        %v1367 = vpop.f32.mrf.mxu0
        %v1368 = vadd.f32 0.0, %v1367
        %v1369 = vpop.f32.mrf.mxu0
        %1370 = vdwg.mxu0
        %v1371 = vmul.f32 %v1290, 0.25
        %v1372 = vmul.f32 %v1368, 0.25
        %v1373 = vadd.f32 %v1371, %v1033
        %v1374 = vadd.f32 %v1372, %v1037
        %v1375 = vsel %vm1040, %v1373, -inf
        %1376 = vmax.xlane.f32.xlu0 %v1375
        %v1377 = vpop.xlane.xlu0 %1376
        %v1378 = vsel %vm1040, %v1374, -inf
        %1379 = vmax.xlane.f32.xlu0 %v1378
        %v1380 = vpop.xlane.xlu0 %1379
        %v1381 = vsub.f32 %v1373, %v1377
        %v1382 = vsub.f32 %v1374, %v1380
        %v1383 = vmul.f32 %v1381, 1.442695
        %v1384 = vpow.pop %v1383
        %v1385 = vmul.f32 %v1382, 1.442695
        %v1386 = vpow.pop %v1385
        %v1387 = vsel %vm1040, %v1384, 0.0
        %1388 = vadd.xlane.f32.xlu0 %v1387
        %v1389 = vpop.xlane.xlu0 %1388
        %v1390 = vsel %vm1040, %v1386, 0.0
        %1391 = vadd.xlane.f32.xlu0 %v1390
        %v1392 = vpop.xlane.xlu0 %1391
        %v1393 = vrcp.pop %v1389
        %v1394 = vrcp.pop %v1392
        %v1395 = vmul.f32 %v1384, %v1393
        %v1396 = vmul.f32 %v1386, %v1394
        %1397 = vrot.lane.b32.xlu0 %v865, 48
        %v1398 = vpop.permute.xlu0 %1397
        %v1401 = vsel %vm1040, %v1395, 0
        %1403 = vmatprep.subr.mxu0 0.0
        %1404 = vmatpush1.msra.mxu0 0.0
        %1405 = vmatprep.subr.mxu0 0.0
        %1406 = vmatpush1.msra.mxu0 0.0
        %1407 = vmatprep.subr.mxu0 0.0
        %1408 = vmatpush1.msra.mxu0 0.0
        %1409 = vmatprep.subr.mxu0 0.0
        %1410 = vmatpush1.msra.mxu0 0.0
        %1411 = vmatprep.subr.mxu0 0.0
        %1412 = vmatpush1.msra.mxu0 0.0
        %1413 = vmatprep.subr.mxu0 0.0
        %1414 = vmatpush1.msra.mxu0 0.0
        %1415 = vmatprep.subr.mxu0 0.0
        %1416 = vmatpush1.msra.mxu0 0.0
        %1417 = vmatprep.subr.mxu0 0.0
        %1418 = vmatpush1.msra.mxu0 0.0
        %1419 = vmatprep.subr.mxu0 0.0
        %1420 = vmatpush1.msra.mxu0 0.0
        %1421 = vmatprep.subr.mxu0 0.0
        %1422 = vmatpush1.msra.mxu0 0.0
        %1423 = vmatprep.subr.mxu0 0.0
        %1424 = vmatpush1.msra.mxu0 0.0
        %1425 = vmatprep.subr.mxu0 0.0
        %1426 = vmatpush1.msra.mxu0 0.0
        %1427 = vmatprep.subr.mxu0 0.0
        %1428 = vmatpush1.msra.mxu0 0.0
        %1429 = vmatprep.subr.mxu0 0.0
        %1430 = vmatpush1.msra.mxu0 0.0
        %1431 = vmatprep.subr.mxu0 0.0
        %1432 = vmatpush1.msra.mxu0 0.0
        %1433 = vmatprep.subr.mxu0 0.0
        %1434 = vmatpush1.msra.mxu0 %v1398
        %1435 = vmatprep.subr.mxu0 0.0
        %1436 = vmatpush2.msra.mxu0 0.0
        %1437 = vmatprep.subr.mxu0 0.0
        %1438 = vmatpush2.msra.mxu0 0.0
        %1439 = vmatprep.subr.mxu0 0.0
        %1440 = vmatpush2.msra.mxu0 0.0
        %1441 = vmatprep.subr.mxu0 0.0
        %1442 = vmatpush2.msra.mxu0 0.0
        %1443 = vmatprep.subr.mxu0 0.0
        %1444 = vmatpush2.msra.mxu0 0.0
        %1445 = vmatprep.subr.mxu0 0.0
        %1446 = vmatpush2.msra.mxu0 0.0
        %1447 = vmatprep.subr.mxu0 0.0
        %1448 = vmatpush2.msra.mxu0 0.0
        %1449 = vmatprep.subr.mxu0 0.0
        %1450 = vmatpush2.msra.mxu0 0.0
        %1451 = vmatprep.subr.mxu0 0.0
        %1452 = vmatpush2.msra.mxu0 0.0
        %1453 = vmatprep.subr.mxu0 0.0
        %1454 = vmatpush2.msra.mxu0 0.0
        %1455 = vmatprep.subr.mxu0 0.0
        %1456 = vmatpush2.msra.mxu0 0.0
        %1457 = vmatprep.subr.mxu0 0.0
        %1458 = vmatpush2.msra.mxu0 0.0
        %1459 = vmatprep.subr.mxu0 0.0
        %1460 = vmatpush2.msra.mxu0 0.0
        %1461 = vmatprep.subr.mxu0 0.0
        %1462 = vmatpush2.msra.mxu0 0.0
        %1463 = vmatprep.subr.mxu0 0.0
        %1464 = vmatpush2.msra.mxu0 0.0
        %1465 = vmatprep.subr.mxu0 0.0
        %1466 = vmatpush2.msra.mxu0 0.0
        %1467 = vmatprep.mubr.f32.mxu0 0.0
        %1468 = vmatmul.mubr.f32.gmra.mxu0 %v1401
        %v1469 = vpop.f32.mrf.mxu0
        %v1470 = vadd.f32 0.0, %v1469
        %v1471 = vpop.f32.mrf.mxu0
        %1472 = vdwg.mxu0
        %1473 = vrot.lane.b32.xlu0 %v870, 48
        %v1474 = vpop.permute.xlu0 %1473
        %v1477 = vsel %vm1040, %v1396, 0
        %1479 = vmatprep.subr.mxu0 0.0
        %1480 = vmatpush1.msra.mxu0 0.0
        %1481 = vmatprep.subr.mxu0 0.0
        %1482 = vmatpush1.msra.mxu0 0.0
        %1483 = vmatprep.subr.mxu0 0.0
        %1484 = vmatpush1.msra.mxu0 0.0
        %1485 = vmatprep.subr.mxu0 0.0
        %1486 = vmatpush1.msra.mxu0 0.0
        %1487 = vmatprep.subr.mxu0 0.0
        %1488 = vmatpush1.msra.mxu0 0.0
        %1489 = vmatprep.subr.mxu0 0.0
        %1490 = vmatpush1.msra.mxu0 0.0
        %1491 = vmatprep.subr.mxu0 0.0
        %1492 = vmatpush1.msra.mxu0 0.0
        %1493 = vmatprep.subr.mxu0 0.0
        %1494 = vmatpush1.msra.mxu0 0.0
        %1495 = vmatprep.subr.mxu0 0.0
        %1496 = vmatpush1.msra.mxu0 0.0
        %1497 = vmatprep.subr.mxu0 0.0
        %1498 = vmatpush1.msra.mxu0 0.0
        %1499 = vmatprep.subr.mxu0 0.0
        %1500 = vmatpush1.msra.mxu0 0.0
        %1501 = vmatprep.subr.mxu0 0.0
        %1502 = vmatpush1.msra.mxu0 0.0
        %1503 = vmatprep.subr.mxu0 0.0
        %1504 = vmatpush1.msra.mxu0 0.0
        %1505 = vmatprep.subr.mxu0 0.0
        %1506 = vmatpush1.msra.mxu0 0.0
        %1507 = vmatprep.subr.mxu0 0.0
        %1508 = vmatpush1.msra.mxu0 0.0
        %1509 = vmatprep.subr.mxu0 0.0
        %1510 = vmatpush1.msra.mxu0 %v1474
        %1511 = vmatprep.subr.mxu0 0.0
        %1512 = vmatpush2.msra.mxu0 0.0
        %1513 = vmatprep.subr.mxu0 0.0
        %1514 = vmatpush2.msra.mxu0 0.0
        %1515 = vmatprep.subr.mxu0 0.0
        %1516 = vmatpush2.msra.mxu0 0.0
        %1517 = vmatprep.subr.mxu0 0.0
        %1518 = vmatpush2.msra.mxu0 0.0
        %1519 = vmatprep.subr.mxu0 0.0
        %1520 = vmatpush2.msra.mxu0 0.0
        %1521 = vmatprep.subr.mxu0 0.0
        %1522 = vmatpush2.msra.mxu0 0.0
        %1523 = vmatprep.subr.mxu0 0.0
        %1524 = vmatpush2.msra.mxu0 0.0
        %1525 = vmatprep.subr.mxu0 0.0
        %1526 = vmatpush2.msra.mxu0 0.0
        %1527 = vmatprep.subr.mxu0 0.0
        %1528 = vmatpush2.msra.mxu0 0.0
        %1529 = vmatprep.subr.mxu0 0.0
        %1530 = vmatpush2.msra.mxu0 0.0
        %1531 = vmatprep.subr.mxu0 0.0
        %1532 = vmatpush2.msra.mxu0 0.0
        %1533 = vmatprep.subr.mxu0 0.0
        %1534 = vmatpush2.msra.mxu0 0.0
        %1535 = vmatprep.subr.mxu0 0.0
        %1536 = vmatpush2.msra.mxu0 0.0
        %1537 = vmatprep.subr.mxu0 0.0
        %1538 = vmatpush2.msra.mxu0 0.0
        %1539 = vmatprep.subr.mxu0 0.0
        %1540 = vmatpush2.msra.mxu0 0.0
        %1541 = vmatprep.subr.mxu0 0.0
        %1542 = vmatpush2.msra.mxu0 0.0
        %1543 = vmatprep.mubr.f32.mxu0 0.0
        %1544 = vmatmul.mubr.f32.gmra.mxu0 %v1477
        %v1545 = vpop.f32.mrf.mxu0
        %v1546 = vadd.f32 0.0, %v1545
        %v1547 = vpop.f32.mrf.mxu0
        %1548 = vdwg.mxu0
        %1551 = vrot.lane.b32.xlu0 %v1470, 16
        %v1552 = vpop.permute.xlu0 %1551
        %1553 = vrot.lane.b32.xlu0 %v1546, 16
        %v1554 = vpop.permute.xlu0 %1553
        %v1557 = vsel %vm876, %v1136, %v1552
        %v1558 = vsel %vm876, %v1212, %v1554
        %v1559 = vld [vmem:[%s682] sm:$0xff]
        %v1560 = vld [vmem:[%s682 + $0x8] sm:$0xff]
        %v1561 = vld [vmem:[%s682 + $0x10] sm:$0xff]
        %v1562 = vld [vmem:[%s682 + $0x18] sm:$0xff]
        %v1563 = vld [vmem:[%s685] sm:$0x1]
        %v1565 = vlaneseq
        %v1566 = vshrl.u32 %v1565, 7
        %v1567 = vsub.s32 0, %v1566
        %v1568 = vrot.slane %v1563, %v1567
        %v1571 = vsel %vm791, %v1557, 0
        %v1574 = vsel %vm791, %v1558, 0
        %1576 = vmatprep.subr.mxu0 0.0
        %1577 = vmatpush1.msra.mxu0 0.0
        %1578 = vmatprep.subr.mxu0 0.0
        %1579 = vmatpush1.msra.mxu0 0.0
        %1580 = vmatprep.subr.mxu0 0.0
        %1581 = vmatpush1.msra.mxu0 0.0
        %1582 = vmatprep.subr.mxu0 0.0
        %1583 = vmatpush1.msra.mxu0 0.0
        %1584 = vmatprep.subr.mxu0 0.0
        %1585 = vmatpush1.msra.mxu0 0.0
        %1586 = vmatprep.subr.mxu0 0.0
        %1587 = vmatpush1.msra.mxu0 0.0
        %1588 = vmatprep.subr.mxu0 0.0
        %1589 = vmatpush1.msra.mxu0 0.0
        %1590 = vmatprep.subr.mxu0 0.0
        %1591 = vmatpush1.msra.mxu0 0.0
        %1592 = vmatprep.subr.mxu0 0.0
        %1593 = vmatpush1.msra.mxu0 0.0
        %1594 = vmatprep.subr.mxu0 0.0
        %1595 = vmatpush1.msra.mxu0 0.0
        %1596 = vmatprep.subr.mxu0 0.0
        %1597 = vmatpush1.msra.mxu0 0.0
        %1598 = vmatprep.subr.mxu0 0.0
        %1599 = vmatpush1.msra.mxu0 0.0
        %1600 = vmatprep.subr.mxu0 0.0
        %1601 = vmatpush1.msra.mxu0 %v1562
        %1602 = vmatprep.subr.mxu0 0.0
        %1603 = vmatpush1.msra.mxu0 %v1561
        %1604 = vmatprep.subr.mxu0 0.0
        %1605 = vmatpush1.msra.mxu0 %v1560
        %1606 = vmatprep.subr.mxu0 0.0
        %1607 = vmatpush1.msra.mxu0 %v1559
        %1608 = vmatprep.subr.mxu0 0.0
        %1609 = vmatpush2.msra.mxu0 0.0
        %1610 = vmatprep.subr.mxu0 0.0
        %1611 = vmatpush2.msra.mxu0 0.0
        %1612 = vmatprep.subr.mxu0 0.0
        %1613 = vmatpush2.msra.mxu0 0.0
        %1614 = vmatprep.subr.mxu0 0.0
        %1615 = vmatpush2.msra.mxu0 0.0
        %1616 = vmatprep.subr.mxu0 0.0
        %1617 = vmatpush2.msra.mxu0 0.0
        %1618 = vmatprep.subr.mxu0 0.0
        %1619 = vmatpush2.msra.mxu0 0.0
        %1620 = vmatprep.subr.mxu0 0.0
        %1621 = vmatpush2.msra.mxu0 0.0
        %1622 = vmatprep.subr.mxu0 0.0
        %1623 = vmatpush2.msra.mxu0 0.0
        %1624 = vmatprep.subr.mxu0 0.0
        %1625 = vmatpush2.msra.mxu0 0.0
        %1626 = vmatprep.subr.mxu0 0.0
        %1627 = vmatpush2.msra.mxu0 0.0
        %1628 = vmatprep.subr.mxu0 0.0
        %1629 = vmatpush2.msra.mxu0 0.0
        %1630 = vmatprep.subr.mxu0 0.0
        %1631 = vmatpush2.msra.mxu0 0.0
        %1632 = vmatprep.subr.mxu0 0.0
        %1633 = vmatpush2.msra.mxu0 0.0
        %1634 = vmatprep.subr.mxu0 0.0
        %1635 = vmatpush2.msra.mxu0 0.0
        %1636 = vmatprep.subr.mxu0 0.0
        %1637 = vmatpush2.msra.mxu0 0.0
        %1638 = vmatprep.subr.mxu0 0.0
        %1639 = vmatpush2.msra.mxu0 0.0
        %1640 = vmatprep.mubr.f32.mxu0 0.0
        %1641 = vmatmul.mubr.f32.gmra.mxu0 %v1571
        %v1642 = vpop.f32.mrf.mxu0
        %v1643 = vadd.f32 %v1568, %v1642
        %v1644 = vpop.f32.mrf.mxu0
        %1645 = vmatprep.mubr.f32.mxu0 0.0
        %1646 = vmatmul.mubr.f32.gmra.mxu0 %v1574
        %v1647 = vpop.f32.mrf.mxu0
        %v1648 = vadd.f32 %v1568, %v1647
        %v1649 = vpop.f32.mrf.mxu0
        %1650 = vdwg.mxu0
        %v1651 = vadd.f32 %v768, %v1643
        %v1652 = vadd.f32 %v769, %v1648
        %v1653 = vld [vmem:[%s688] sm:$0x1]
        %v1654 = vld [vmem:[%s691] sm:$0x1]
        %v1655 = vsel %vm791, %v1651, 0.0
        %1656 = vadd.xlane.f32.xlu0 %v1655
        %v1657 = vpop.xlane.xlu0 %1656
        %v1658 = vsel %vm791, %v1652, 0.0
        %1659 = vadd.xlane.f32.xlu0 %v1658
        %v1660 = vpop.xlane.xlu0 %1659
        %v1661 = vrcp.pop 32.0
        %v1662 = vmul.f32 %v1657, %v1661
        %v1663 = vmul.f32 %v1660, %v1661
        %v1664 = vsub.f32 %v1651, %v1662
        %v1665 = vsub.f32 %v1652, %v1663
        %v1666 = vmul.f32 %v1664, %v1664
        %v1667 = vmul.f32 %v1665, %v1665
        %v1668 = vsel %vm791, %v1666, 0.0
        %1669 = vadd.xlane.f32.xlu0 %v1668
        %v1670 = vpop.xlane.xlu0 %1669
        %v1671 = vsel %vm791, %v1667, 0.0
        %1672 = vadd.xlane.f32.xlu0 %v1671
        %v1673 = vpop.xlane.xlu0 %1672
        %v1674 = vmul.f32 %v1670, %v1661
        %v1675 = vmul.f32 %v1673, %v1661
        %v1676 = vadd.f32 %v1674, 1e-12
        %v1677 = vadd.f32 %v1675, 1e-12
        %v1678 = vrsqrt.pop %v1676
        %v1679 = vrsqrt.pop %v1677
        %v1680 = vmul.f32 %v1664, %v1678
        %v1681 = vmul.f32 %v1665, %v1679
        %v1683 = vlaneseq
        %v1684 = vshrl.u32 %v1683, 7
        %v1685 = vsub.s32 0, %v1684
        %v1686 = vrot.slane %v1653, %v1685
        %v1688 = vmul.f32 %v1680, %v1686
        %v1689 = vmul.f32 %v1681, %v1686
        %v1691 = vlaneseq
        %v1692 = vshrl.u32 %v1691, 7
        %v1693 = vsub.s32 0, %v1692
        %v1694 = vrot.slane %v1654, %v1693
        %v1696 = vadd.f32 %v1688, %v1694
        %v1697 = vadd.f32 %v1689, %v1694
        %v1698 = vld [vmem:[%s696] sm:$0xff]
        %v1699 = vld [vmem:[%s696 + $0x8] sm:$0xff]
        %v1700 = vld [vmem:[%s696 + $0x10] sm:$0xff]
        %v1701 = vld [vmem:[%s696 + $0x18] sm:$0xff]
        %v1702 = vld [vmem:[%s699] sm:$0x1]
        %v1704 = vlaneseq
        %v1705 = vshrl.u32 %v1704, 7
        %v1706 = vsub.s32 0, %v1705
        %v1707 = vrot.slane %v1702, %v1706
        %v1710 = vsel %vm791, %v1696, 0
        %v1713 = vsel %vm791, %v1697, 0
        %1715 = vmatprep.subr.mxu0 0.0
        %1716 = vmatpush1.msra.mxu0 0.0
        %1717 = vmatprep.subr.mxu0 0.0
        %1718 = vmatpush1.msra.mxu0 0.0
        %1719 = vmatprep.subr.mxu0 0.0
        %1720 = vmatpush1.msra.mxu0 0.0
        %1721 = vmatprep.subr.mxu0 0.0
        %1722 = vmatpush1.msra.mxu0 0.0
        %1723 = vmatprep.subr.mxu0 0.0
        %1724 = vmatpush1.msra.mxu0 0.0
        %1725 = vmatprep.subr.mxu0 0.0
        %1726 = vmatpush1.msra.mxu0 0.0
        %1727 = vmatprep.subr.mxu0 0.0
        %1728 = vmatpush1.msra.mxu0 0.0
        %1729 = vmatprep.subr.mxu0 0.0
        %1730 = vmatpush1.msra.mxu0 0.0
        %1731 = vmatprep.subr.mxu0 0.0
        %1732 = vmatpush1.msra.mxu0 0.0
        %1733 = vmatprep.subr.mxu0 0.0
        %1734 = vmatpush1.msra.mxu0 0.0
        %1735 = vmatprep.subr.mxu0 0.0
        %1736 = vmatpush1.msra.mxu0 0.0
        %1737 = vmatprep.subr.mxu0 0.0
        %1738 = vmatpush1.msra.mxu0 0.0
        %1739 = vmatprep.subr.mxu0 0.0
        %1740 = vmatpush1.msra.mxu0 %v1701
        %1741 = vmatprep.subr.mxu0 0.0
        %1742 = vmatpush1.msra.mxu0 %v1700
        %1743 = vmatprep.subr.mxu0 0.0
        %1744 = vmatpush1.msra.mxu0 %v1699
        %1745 = vmatprep.subr.mxu0 0.0
        %1746 = vmatpush1.msra.mxu0 %v1698
        %1747 = vmatprep.subr.mxu0 0.0
        %1748 = vmatpush2.msra.mxu0 0.0
        %1749 = vmatprep.subr.mxu0 0.0
        %1750 = vmatpush2.msra.mxu0 0.0
        %1751 = vmatprep.subr.mxu0 0.0
        %1752 = vmatpush2.msra.mxu0 0.0
        %1753 = vmatprep.subr.mxu0 0.0
        %1754 = vmatpush2.msra.mxu0 0.0
        %1755 = vmatprep.subr.mxu0 0.0
        %1756 = vmatpush2.msra.mxu0 0.0
        %1757 = vmatprep.subr.mxu0 0.0
        %1758 = vmatpush2.msra.mxu0 0.0
        %1759 = vmatprep.subr.mxu0 0.0
        %1760 = vmatpush2.msra.mxu0 0.0
        %1761 = vmatprep.subr.mxu0 0.0
        %1762 = vmatpush2.msra.mxu0 0.0
        %1763 = vmatprep.subr.mxu0 0.0
        %1764 = vmatpush2.msra.mxu0 0.0
        %1765 = vmatprep.subr.mxu0 0.0
        %1766 = vmatpush2.msra.mxu0 0.0
        %1767 = vmatprep.subr.mxu0 0.0
        %1768 = vmatpush2.msra.mxu0 0.0
        %1769 = vmatprep.subr.mxu0 0.0
        %1770 = vmatpush2.msra.mxu0 0.0
        %1771 = vmatprep.subr.mxu0 0.0
        %1772 = vmatpush2.msra.mxu0 0.0
        %1773 = vmatprep.subr.mxu0 0.0
        %1774 = vmatpush2.msra.mxu0 0.0
        %1775 = vmatprep.subr.mxu0 0.0
        %1776 = vmatpush2.msra.mxu0 0.0
        %1777 = vmatprep.subr.mxu0 0.0
        %1778 = vmatpush2.msra.mxu0 0.0
        %1779 = vmatprep.mubr.f32.mxu0 0.0
        %1780 = vmatmul.mubr.f32.gmra.mxu0 %v1710
        %v1781 = vpop.f32.mrf.mxu0
        %v1782 = vadd.f32 %v1707, %v1781
        %v1783 = vpop.f32.mrf.mxu0
        %1784 = vmatprep.mubr.f32.mxu0 0.0
        %1785 = vmatmul.mubr.f32.gmra.mxu0 %v1713
        %v1786 = vpop.f32.mrf.mxu0
        %v1787 = vadd.f32 %v1707, %v1786
        %v1788 = vpop.f32.mrf.mxu0
        %1789 = vdwg.mxu0
        %v1790 = vmul.f32 %v1782, %v1782
        %v1791 = vmul.f32 %v1787, %v1787
        %v1792 = vmul.f32 %v1782, %v1790
        %v1793 = vmul.f32 %v1787, %v1791
        %v1794 = vmul.f32 %v1792, 0.044715
        %v1795 = vmul.f32 %v1793, 0.044715
        %v1796 = vadd.f32 %v1782, %v1794
        %v1797 = vadd.f32 %v1787, %v1795
        %v1798 = vmul.f32 %v1796, 0.7978846
        %v1799 = vmul.f32 %v1797, 0.7978846
        %v1800 = vtanh.pop %v1798
        %v1801 = vtanh.pop %v1799
        %v1802 = vadd.f32 %v1800, 1.0
        %v1803 = vadd.f32 %v1801, 1.0
        %v1804 = vmul.f32 %v1802, 0.5
        %v1805 = vmul.f32 %v1803, 0.5
        %v1806 = vmul.f32 %v1782, %v1804
        %v1807 = vmul.f32 %v1787, %v1805
        %v1808 = vld [vmem:[%s704] sm:$0xff]
        %v1809 = vld [vmem:[%s704 + $0x8] sm:$0xff]
        %v1810 = vld [vmem:[%s704 + $0x10] sm:$0xff]
        %v1811 = vld [vmem:[%s704 + $0x18] sm:$0xff]
        %v1812 = vld [vmem:[%s704 + $0x20] sm:$0xff]
        %v1813 = vld [vmem:[%s704 + $0x28] sm:$0xff]
        %v1814 = vld [vmem:[%s704 + $0x30] sm:$0xff]
        %v1815 = vld [vmem:[%s704 + $0x38] sm:$0xff]
        %v1816 = vld [vmem:[%s707] sm:$0x1]
        %v1818 = vlaneseq
        %v1819 = vshrl.u32 %v1818, 7
        %v1820 = vsub.s32 0, %v1819
        %v1821 = vrot.slane %v1816, %v1820
        %vm1823 = vcmask 523264
        %v1825 = vsel %vm1823, %v1806, 0
        %v1828 = vsel %vm1823, %v1807, 0
        %1830 = vmatprep.subr.mxu0 0.0
        %1831 = vmatpush1.msra.mxu0 0.0
        %1832 = vmatprep.subr.mxu0 0.0
        %1833 = vmatpush1.msra.mxu0 0.0
        %1834 = vmatprep.subr.mxu0 0.0
        %1835 = vmatpush1.msra.mxu0 0.0
        %1836 = vmatprep.subr.mxu0 0.0
        %1837 = vmatpush1.msra.mxu0 0.0
        %1838 = vmatprep.subr.mxu0 0.0
        %1839 = vmatpush1.msra.mxu0 0.0
        %1840 = vmatprep.subr.mxu0 0.0
        %1841 = vmatpush1.msra.mxu0 0.0
        %1842 = vmatprep.subr.mxu0 0.0
        %1843 = vmatpush1.msra.mxu0 0.0
        %1844 = vmatprep.subr.mxu0 0.0
        %1845 = vmatpush1.msra.mxu0 0.0
        %1846 = vmatprep.subr.mxu0 0.0
        %1847 = vmatpush1.msra.mxu0 %v1815
        %1848 = vmatprep.subr.mxu0 0.0
        %1849 = vmatpush1.msra.mxu0 %v1814
        %1850 = vmatprep.subr.mxu0 0.0
        %1851 = vmatpush1.msra.mxu0 %v1813
        %1852 = vmatprep.subr.mxu0 0.0
        %1853 = vmatpush1.msra.mxu0 %v1812
        %1854 = vmatprep.subr.mxu0 0.0
        %1855 = vmatpush1.msra.mxu0 %v1811
        %1856 = vmatprep.subr.mxu0 0.0
        %1857 = vmatpush1.msra.mxu0 %v1810
        %1858 = vmatprep.subr.mxu0 0.0
        %1859 = vmatpush1.msra.mxu0 %v1809
        %1860 = vmatprep.subr.mxu0 0.0
        %1861 = vmatpush1.msra.mxu0 %v1808
        %1862 = vmatprep.subr.mxu0 0.0
        %1863 = vmatpush2.msra.mxu0 0.0
        %1864 = vmatprep.subr.mxu0 0.0
        %1865 = vmatpush2.msra.mxu0 0.0
        %1866 = vmatprep.subr.mxu0 0.0
        %1867 = vmatpush2.msra.mxu0 0.0
        %1868 = vmatprep.subr.mxu0 0.0
        %1869 = vmatpush2.msra.mxu0 0.0
        %1870 = vmatprep.subr.mxu0 0.0
        %1871 = vmatpush2.msra.mxu0 0.0
        %1872 = vmatprep.subr.mxu0 0.0
        %1873 = vmatpush2.msra.mxu0 0.0
        %1874 = vmatprep.subr.mxu0 0.0
        %1875 = vmatpush2.msra.mxu0 0.0
        %1876 = vmatprep.subr.mxu0 0.0
        %1877 = vmatpush2.msra.mxu0 0.0
        %1878 = vmatprep.subr.mxu0 0.0
        %1879 = vmatpush2.msra.mxu0 0.0
        %1880 = vmatprep.subr.mxu0 0.0
        %1881 = vmatpush2.msra.mxu0 0.0
        %1882 = vmatprep.subr.mxu0 0.0
        %1883 = vmatpush2.msra.mxu0 0.0
        %1884 = vmatprep.subr.mxu0 0.0
        %1885 = vmatpush2.msra.mxu0 0.0
        %1886 = vmatprep.subr.mxu0 0.0
        %1887 = vmatpush2.msra.mxu0 0.0
        %1888 = vmatprep.subr.mxu0 0.0
        %1889 = vmatpush2.msra.mxu0 0.0
        %1890 = vmatprep.subr.mxu0 0.0
        %1891 = vmatpush2.msra.mxu0 0.0
        %1892 = vmatprep.subr.mxu0 0.0
        %1893 = vmatpush2.msra.mxu0 0.0
        %1894 = vmatprep.mubr.f32.mxu0 0.0
        %1895 = vmatmul.mubr.f32.gmra.mxu0 %v1825
        %v1896 = vpop.f32.mrf.mxu0
        %v1897 = vadd.f32 %v1821, %v1896
        %v1898 = vpop.f32.mrf.mxu0
        %1899 = vmatprep.mubr.f32.mxu0 0.0
        %1900 = vmatmul.mubr.f32.gmra.mxu0 %v1828
        %v1901 = vpop.f32.mrf.mxu0
        %v1902 = vadd.f32 %v1821, %v1901
        %v1903 = vpop.f32.mrf.mxu0
        %1904 = vdwg.mxu0
        %v1905 = vadd.f32 %v1696, %v1897
        %v1906 = vadd.f32 %v1697, %v1902
        %v1907 = vld [vmem:[%s710] sm:$0x1]
        %v1908 = vld [vmem:[%s713] sm:$0x1]
        %v1909 = vsel %vm791, %v1905, 0.0
        %1910 = vadd.xlane.f32.xlu0 %v1909
        %v1911 = vpop.xlane.xlu0 %1910
        %v1912 = vsel %vm791, %v1906, 0.0
        %1913 = vadd.xlane.f32.xlu0 %v1912
        %v1914 = vpop.xlane.xlu0 %1913
        %v1915 = vmul.f32 %v1911, %v1661
        %v1916 = vmul.f32 %v1914, %v1661
        %v1917 = vsub.f32 %v1905, %v1915
        %v1918 = vsub.f32 %v1906, %v1916
        %v1919 = vmul.f32 %v1917, %v1917
        %v1920 = vmul.f32 %v1918, %v1918
        %v1921 = vsel %vm791, %v1919, 0.0
        %1922 = vadd.xlane.f32.xlu0 %v1921
        %v1923 = vpop.xlane.xlu0 %1922
        %v1924 = vsel %vm791, %v1920, 0.0
        %1925 = vadd.xlane.f32.xlu0 %v1924
        %v1926 = vpop.xlane.xlu0 %1925
        %v1927 = vmul.f32 %v1923, %v1661
        %v1928 = vmul.f32 %v1926, %v1661
        %v1929 = vadd.f32 %v1927, 1e-12
        %v1930 = vadd.f32 %v1928, 1e-12
        %v1931 = vrsqrt.pop %v1929
        %v1932 = vrsqrt.pop %v1930
        %v1933 = vmul.f32 %v1917, %v1931
        %v1934 = vmul.f32 %v1918, %v1932
        %v1936 = vlaneseq
        %v1937 = vshrl.u32 %v1936, 7
        %v1938 = vsub.s32 0, %v1937
        %v1939 = vrot.slane %v1907, %v1938
        %v1941 = vmul.f32 %v1933, %v1939
        %v1942 = vmul.f32 %v1934, %v1939
        %v1944 = vlaneseq
        %v1945 = vshrl.u32 %v1944, 7
        %v1946 = vsub.s32 0, %v1945
        %v1947 = vrot.slane %v1908, %v1946
        %v1949 = vadd.f32 %v1941, %v1947
        %v1950 = vadd.f32 %v1942, %v1947
        %1951 = vst.msk [vmem:[#allocation2] sm:$0xff] %vm791, %v1949
        %1952 = vst.msk [vmem:[#allocation2 + $0x8] sm:$0xff] %vm791, %v1950
        %p1953 = scmp.eq.s32.totalorder %s36, 1
        // Predicated region
        $region93: #{kobert_forward.1} parent=87 // pred_check
          %p1954 = pneg %p1953
        $region94: #{kobert_forward.1} parent=87 // pred_check_branch
          %1956 = sbr.rel (%p1954) target = $region96
        $region95: #{kobert_forward.1} parent=87 // pred_region
          %v1958 = vrot.slane %v1950, 7
          %vm1960 = vcmask 1040384
          %v1961 = vsel %vm1960, %v1949, %v1958
          %v1962 = vld [vmem:[%s16] sm:$0xff]
          %v1963 = vld [vmem:[%s16 + $0x8] sm:$0xff]
          %v1964 = vld [vmem:[%s16 + $0x10] sm:$0xff]
          %v1965 = vld [vmem:[%s16 + $0x18] sm:$0xff]
          %v1966 = vld [vmem:[%s17] sm:$0x1]
          %v1968 = vlaneseq
          %v1969 = vshrl.u32 %v1968, 7
          %v1970 = vsub.s32 0, %v1969
          %v1971 = vrot.slane %v1966, %v1970
          %v1974 = vsel %vm791, %v1961, 0
          %1976 = vmatprep.subr.mxu0 0.0
          %1977 = vmatpush1.msra.mxu0 0.0
          %1978 = vmatprep.subr.mxu0 0.0
          %1979 = vmatpush1.msra.mxu0 0.0
          %1980 = vmatprep.subr.mxu0 0.0
          %1981 = vmatpush1.msra.mxu0 0.0
          %1982 = vmatprep.subr.mxu0 0.0
          %1983 = vmatpush1.msra.mxu0 0.0
          %1984 = vmatprep.subr.mxu0 0.0
          %1985 = vmatpush1.msra.mxu0 0.0
          %1986 = vmatprep.subr.mxu0 0.0
          %1987 = vmatpush1.msra.mxu0 0.0
          %1988 = vmatprep.subr.mxu0 0.0
          %1989 = vmatpush1.msra.mxu0 0.0
          %1990 = vmatprep.subr.mxu0 0.0
          %1991 = vmatpush1.msra.mxu0 0.0
          %1992 = vmatprep.subr.mxu0 0.0
          %1993 = vmatpush1.msra.mxu0 0.0
          %1994 = vmatprep.subr.mxu0 0.0
          %1995 = vmatpush1.msra.mxu0 0.0
          %1996 = vmatprep.subr.mxu0 0.0
          %1997 = vmatpush1.msra.mxu0 0.0
          %1998 = vmatprep.subr.mxu0 0.0
          %1999 = vmatpush1.msra.mxu0 0.0
          %2000 = vmatprep.subr.mxu0 0.0
          %2001 = vmatpush1.msra.mxu0 %v1965
          %2002 = vmatprep.subr.mxu0 0.0
          %2003 = vmatpush1.msra.mxu0 %v1964
          %2004 = vmatprep.subr.mxu0 0.0
          %2005 = vmatpush1.msra.mxu0 %v1963
          %2006 = vmatprep.subr.mxu0 0.0
          %2007 = vmatpush1.msra.mxu0 %v1962
          %2008 = vmatprep.subr.mxu0 0.0
          %2009 = vmatpush2.msra.mxu0 0.0
          %2010 = vmatprep.subr.mxu0 0.0
          %2011 = vmatpush2.msra.mxu0 0.0
          %2012 = vmatprep.subr.mxu0 0.0
          %2013 = vmatpush2.msra.mxu0 0.0
          %2014 = vmatprep.subr.mxu0 0.0
          %2015 = vmatpush2.msra.mxu0 0.0
          %2016 = vmatprep.subr.mxu0 0.0
          %2017 = vmatpush2.msra.mxu0 0.0
          %2018 = vmatprep.subr.mxu0 0.0
          %2019 = vmatpush2.msra.mxu0 0.0
          %2020 = vmatprep.subr.mxu0 0.0
          %2021 = vmatpush2.msra.mxu0 0.0
          %2022 = vmatprep.subr.mxu0 0.0
          %2023 = vmatpush2.msra.mxu0 0.0
          %2024 = vmatprep.subr.mxu0 0.0
          %2025 = vmatpush2.msra.mxu0 0.0
          %2026 = vmatprep.subr.mxu0 0.0
          %2027 = vmatpush2.msra.mxu0 0.0
          %2028 = vmatprep.subr.mxu0 0.0
          %2029 = vmatpush2.msra.mxu0 0.0
          %2030 = vmatprep.subr.mxu0 0.0
          %2031 = vmatpush2.msra.mxu0 0.0
          %2032 = vmatprep.subr.mxu0 0.0
          %2033 = vmatpush2.msra.mxu0 0.0
          %2034 = vmatprep.subr.mxu0 0.0
          %2035 = vmatpush2.msra.mxu0 0.0
          %2036 = vmatprep.subr.mxu0 0.0
          %2037 = vmatpush2.msra.mxu0 0.0
          %2038 = vmatprep.subr.mxu0 0.0
          %2039 = vmatpush2.msra.mxu0 0.0
          %2040 = vmatprep.mubr.f32.mxu0 0.0
          %2041 = vmatmul.mubr.f32.gmra.mxu0 %v1974
          %v2042 = vpop.f32.mrf.mxu0
          %v2043 = vadd.f32 %v1971, %v2042
          %v2044 = vpop.f32.mrf.mxu0
          %2045 = vdwg.mxu0
          %v2046 = vtanh.pop %v2043
          %vm2047 = vcmask 254976
          %2048 = vst.msk [vmem:[#allocation5] sm:$0x3] %vm2047, %v2046
        $region96: #{kobert_forward.1} parent=87 // pred_fallthru
          _
        // Predicated region
        $region97: #{kobert_forward.1} parent=87 // pred_check
          %p2049 = pneg %p466
        $region98: #{kobert_forward.1} parent=87 // pred_check_branch
          %2051 = sbr.rel (%p2049) target = $region100
        $region99: #{kobert_forward.1} parent=87 // pred_region
          %s2053 = ssub.s32 32, 32
          %2054 = vsyncadd [#allocation6], %s2053
          %s2056 = sshll.u32 [#allocation5], 4
          %s2057 = int_to_ptr.vmem [resolvable:$true] %s2056
          %2059 = dma.vmem_to_hbm [thread:$0]  %s2057, 32, %s18, [#allocation6]
        $region100: #{kobert_forward.1} parent=87 // pred_fallthru
          _
        // Predicated region
        $region101: #{kobert_forward.1} parent=87 // pred_check
          %p2060 = pneg %p466
        $region102: #{kobert_forward.1} parent=87 // pred_check_branch
          %2062 = sbr.rel (%p2060) target = $region104
        $region103: #{kobert_forward.1} parent=87 // pred_region
          %2063 = dma.done [#allocation6], 32
        $region104: #{kobert_forward.1} parent=87 // pred_fallthru
          _
      $region88: #{kobert_forward.1} parent=5 // pred_fallthru
        _
      %p2064 = scmp.le.s32.totalorder 2, %s31
      // Predicated region
      $region105: #{kobert_forward.1} parent=5 // pred_check
        %p2065 = pneg %p2064
      $region106: #{kobert_forward.1} parent=5 // pred_check_branch
        %2067 = sbr.rel (%p2065) target = $region108
      $region107: #{kobert_forward.1} parent=5 // pred_region
        %s2068 = ssub.s32 %s31, 2
      $region108: #{kobert_forward.1} parent=5 // pred_fallthru
        _
    $region6: #{kobert_forward.1} parent=1 // loop_footer
      %s35 = sadd.s32 1, %s31
    $region7: #{kobert_forward.1} parent=1 // loop_footer_branch
      %30 = sbr.rel target = $region3
    $region8: #{kobert_forward.1} parent=1 // loop_exit
      _
    %2069 = vsyncpa [#allocation6], 1
    %s2070 = scalar_lea.sflag [#allocation6], 1
    %2071 = vsyncpa %s2070, 1

</llo_original>
